<compile_context>
chip_gen: v6e
topology: v6e:2x2x1
jax: 0.10.0
libtpu: 0.0.40
codegen_flags: <defaults>
</compile_context>

<pallas_src>
import jax
import jax.numpy as jnp
from jax.experimental import pallas as pl
from jax.experimental.pallas import tpu as pltpu

EPS = 1e-5

_TILE_CANDIDATES = (512, 256, 128)     # lane-dense tiles (multiples of 128), largest first
_VMEM_BUDGET_BYTES = 24 * 1024 * 1024  # conservative: fits every generation's scoped default


def _pick_tiles(n, d_in, d_out, in_bytes, out_bytes):
    """Largest (tile_n, tile_k) that divide the dims and fit a conservative VMEM budget."""
    def divisors(dim):
        opts = [t for t in _TILE_CANDIDATES if dim % t == 0]
        return opts if opts else [dim]  # fall back to a single full-extent block

    best = None
    for tn in divisors(d_out):
        for tk in divisors(d_in):
            vmem = (
                2 * n * tk * in_bytes          # x tile, double-buffered
                + 2 * tn * tk * in_bytes       # weight tile, double-buffered
                + n * tn * 4                   # f32 accumulator scratch
                + 2 * n * tn * out_bytes       # output tile, double-buffered
                + 4 * tn * 4                   # gamma/beta slices, double-buffered
            )
            if vmem <= _VMEM_BUDGET_BYTES:
                return tn, tk
            best = (tn, tk)  # remember the smallest combo in case nothing fits the budget
    return best


def _bn_linear_kernel(x_ref, w_ref, gamma_ref, beta_ref, o_ref, acc_ref):
    k = pl.program_id(1)

    @pl.when(k == 0)
    def _():
        acc_ref[...] = jnp.zeros_like(acc_ref)

    # Linear partial product: (N, TILE_K) x (TILE_N, TILE_K) contracted on K -> (N, TILE_N).
    # Operands stay in their native dtype; the MXU accumulates in f32.
    acc_ref[...] += jax.lax.dot_general(
        x_ref[...], w_ref[...],
        dimension_numbers=(((1,), (1,)), ((), ())),
        preferred_element_type=jnp.float32)

    # BN epilogue on the last K step: one stats pass over the accumulator, then a single
    # fused multiply-add per element (scale/shift are tiny (1, TILE_N) rows).
    @pl.when(k == pl.num_programs(1) - 1)
    def _():
        y = acc_ref[...]                                   # (N, TILE_N) f32
        inv_n = 1.0 / y.shape[0]
        mean = jnp.sum(y, axis=0, keepdims=True) * inv_n
        sumsq = jnp.sum(y * y, axis=0, keepdims=True) * inv_n
        var = jnp.maximum(sumsq - mean * mean, 0.0)        # biased variance (BN training mode)
        scale = jax.lax.rsqrt(var + EPS) * gamma_ref[...]
        shift = beta_ref[...] - mean * scale
        o_ref[...] = (y * scale + shift).astype(o_ref.dtype)


@jax.jit
def batch_normalized_linear(x, weight, bias, gamma, beta):
    """x: (N, D_in); weight: (D_out, D_in) [PyTorch layout]; bias/gamma/beta: (D_out,).

    `bias` is accepted for module-signature fidelity but is not used: a per-feature bias is
    removed exactly by BatchNorm's batch-mean subtraction, so it never reaches the kernel.
    """
    del bias
    n, d_in = x.shape
    d_out = weight.shape[0]

    tile_n, tile_k = _pick_tiles(n, d_in, d_out, x.dtype.itemsize, x.dtype.itemsize)
    grid = (d_out // tile_n, d_in // tile_k)

    # BN affine params as (1, D_out) f32 rows; only the needed (1, TILE_N) slice is resident.
    g2 = gamma.reshape(1, d_out).astype(jnp.float32)
    b2 = beta.reshape(1, d_out).astype(jnp.float32)

    return pl.pallas_call(
        _bn_linear_kernel,
        out_shape=jax.ShapeDtypeStruct((n, d_out), x.dtype),
        grid_spec=pltpu.PrefetchScalarGridSpec(
            num_scalar_prefetch=0,
            grid=grid,
            in_specs=[
                pl.BlockSpec((n, tile_k), lambda j, k: (0, k)),        # x tile
                pl.BlockSpec((tile_n, tile_k), lambda j, k: (j, k)),   # weight (D_out, D_in)
                pl.BlockSpec((1, tile_n), lambda j, k: (0, j)),        # gamma slice
                pl.BlockSpec((1, tile_n), lambda j, k: (0, j)),        # beta slice
            ],
            out_specs=pl.BlockSpec((n, tile_n), lambda j, k: (0, j)),
            scratch_shapes=[pltpu.VMEM((n, tile_n), jnp.float32)],
        ),
        compiler_params=pltpu.CompilerParams(
            dimension_semantics=("parallel", "arbitrary"),
            vmem_limit_bytes=64 * 1024 * 1024),
    )(x, weight, g2, b2)


def _reference(x, weight, bias, gamma, beta):
    y = x.astype(jnp.float32) @ weight.astype(jnp.float32).T + bias
    mean = jnp.mean(y, axis=0, keepdims=True)
    var = jnp.mean((y - mean) ** 2, axis=0, keepdims=True)  # biased, as in BN training
    return ((y - mean) / jnp.sqrt(var + EPS)) * gamma + beta


if __name__ == "__main__":
    key = jax.random.PRNGKey(0)
    k_x, k_w, k_b = jax.random.split(key, 3)

    # Small but grid-exercising shapes: tiles of 256 -> grid (2, 2), K accumulation + 2 out tiles.
    N, D_IN, D_OUT = 64, 512, 512

    x = jax.random.normal(k_x, (N, D_IN), dtype=jnp.float32)

    # Deterministic parameter init (mimic nn.Linear: U(-1/sqrt(in), 1/sqrt(in))).
    bound = 1.0 / (D_IN ** 0.5)
    weight = jax.random.uniform(k_w, (D_OUT, D_IN), minval=-bound, maxval=bound,
                                dtype=jnp.float32)
    bias = jax.random.uniform(k_b, (D_OUT,), minval=-bound, maxval=bound,
                              dtype=jnp.float32)
    # BatchNorm1d affine init.
    gamma = jnp.ones((D_OUT,), dtype=jnp.float32)
    beta = jnp.zeros((D_OUT,), dtype=jnp.float32)

    out = jax.block_until_ready(batch_normalized_linear(x, weight, bias, gamma, beta))

    ref = _reference(x, weight, bias, gamma, beta)
    assert out.shape == (N, D_OUT)
    assert jnp.allclose(out, ref, atol=1e-4, rtol=1e-4), "mismatch vs pure-JAX reference"

    print("KERNEL_OK")
</pallas_src>

<mosaic_0001>
module attributes {stable_mosaic.version = 11 : i64} {
  func.func @_bn_linear_kernel(%arg0: i32, %arg1: i32, %arg2: memref<64x512xf32, #tpu.memory_space<vmem>>, %arg3: memref<512x512xf32, #tpu.memory_space<vmem>>, %arg4: memref<1x512xf32, #tpu.memory_space<vmem>>, %arg5: memref<1x512xf32, #tpu.memory_space<vmem>>, %arg6: memref<64x512xf32, #tpu.memory_space<vmem>>, %arg7: memref<64x512xf32, #tpu.memory_space<vmem>>) attributes {dimension_semantics = [#tpu.dimension_semantics<parallel>, #tpu.dimension_semantics<arbitrary>], iteration_bounds = array<i64: 1, 1>, scalar_prefetch = 0 : i64, scratch_operands = 1 : i64, tpu.core_type = #tpu.core_type<tc>, window_params = [{transform_indices = @transform_0, window_bounds = array<i64: 64, 512>}, {transform_indices = @transform_1, window_bounds = array<i64: 512, 512>}, {transform_indices = @transform_2, window_bounds = array<i64: 1, 512>}, {transform_indices = @transform_3, window_bounds = array<i64: 1, 512>}, {transform_indices = @transform_4, window_bounds = array<i64: 64, 512>}]} {
    %c0_i32 = arith.constant 0 : i32
    %0 = arith.cmpi eq, %arg1, %c0_i32 : i32
    %1 = arith.extui %0 : i1 to i32
    %c0_i32_0 = arith.constant 0 : i32
    %2 = arith.cmpi ne, %1, %c0_i32_0 : i32
    scf.if %2 {
      %cst_10 = arith.constant 0.000000e+00 : f32
      %12 = vector.broadcast %cst_10 : f32 to vector<64x512xf32>
      %c0_11 = arith.constant 0 : index
      %c0_12 = arith.constant 0 : index
      %13 = vector.load %arg7[%c0_11, %c0_12] : memref<64x512xf32, #tpu.memory_space<vmem>>, vector<64x512xf32>
      tpu.vector_store %arg7[%c0_11, %c0_12], %12 {strides = array<i32>} : memref<64x512xf32, #tpu.memory_space<vmem>>, vector<64x512xf32>,
    } else {
    }
    %c0 = arith.constant 0 : index
    %c0_1 = arith.constant 0 : index
    %3 = vector.load %arg7[%c0, %c0_1] : memref<64x512xf32, #tpu.memory_space<vmem>>, vector<64x512xf32>
    %c0_2 = arith.constant 0 : index
    %c0_3 = arith.constant 0 : index
    %4 = vector.load %arg2[%c0_2, %c0_3] : memref<64x512xf32, #tpu.memory_space<vmem>>, vector<64x512xf32>
    %c0_4 = arith.constant 0 : index
    %c0_5 = arith.constant 0 : index
    %5 = vector.load %arg3[%c0_4, %c0_5] : memref<512x512xf32, #tpu.memory_space<vmem>>, vector<512x512xf32>
    %cst = arith.constant dense<0.000000e+00> : vector<64x512xf32>
    %6 = tpu.matmul %4, %5, %cst {dimension_numbers = #tpu.dot_dimension_numbers<[1], [1], [0], [0], [0, 0, 1, 0], [], []>} : vector<64x512xf32>, vector<512x512xf32>, vector<64x512xf32> -> vector<64x512xf32>
    %7 = arith.addf %3, %6 : vector<64x512xf32>
    %c0_6 = arith.constant 0 : index
    %c0_7 = arith.constant 0 : index
    %8 = vector.load %arg7[%c0_6, %c0_7] : memref<64x512xf32, #tpu.memory_space<vmem>>, vector<64x512xf32>
    tpu.vector_store %arg7[%c0_6, %c0_7], %7 {strides = array<i32>} : memref<64x512xf32, #tpu.memory_space<vmem>>, vector<64x512xf32>,
    %c0_i32_8 = arith.constant 0 : i32
    %9 = arith.cmpi eq, %arg1, %c0_i32_8 : i32
    %10 = arith.extui %9 : i1 to i32
    %c0_i32_9 = arith.constant 0 : i32
    %11 = arith.cmpi ne, %10, %c0_i32_9 : i32
    scf.if %11 {
      %c0_10 = arith.constant 0 : index
      %c0_11 = arith.constant 0 : index
      %12 = vector.load %arg7[%c0_10, %c0_11] : memref<64x512xf32, #tpu.memory_space<vmem>>, vector<64x512xf32>
      %cst_12 = arith.constant dense<0.000000e+00> : vector<512xf32>
      %13 = vector.multi_reduction <add>, %12, %cst_12 [0] : vector<64x512xf32> to vector<512xf32>
      %14 = vector.shape_cast %13 : vector<512xf32> to vector<1x512xf32>
      %cst_13 = arith.constant 1.562500e-02 : f32
      %15 = vector.broadcast %cst_13 : f32 to vector<1x512xf32>
      %16 = arith.mulf %14, %15 : vector<1x512xf32>
      %17 = arith.mulf %12, %12 : vector<64x512xf32>
      %cst_14 = arith.constant dense<0.000000e+00> : vector<512xf32>
      %18 = vector.multi_reduction <add>, %17, %cst_14 [0] : vector<64x512xf32> to vector<512xf32>
      %19 = vector.shape_cast %18 : vector<512xf32> to vector<1x512xf32>
      %cst_15 = arith.constant 1.562500e-02 : f32
      %20 = vector.broadcast %cst_15 : f32 to vector<1x512xf32>
      %21 = arith.mulf %19, %20 : vector<1x512xf32>
      %22 = arith.mulf %16, %16 : vector<1x512xf32>
      %23 = arith.subf %21, %22 : vector<1x512xf32>
      %cst_16 = arith.constant 0.000000e+00 : f32
      %24 = vector.broadcast %cst_16 : f32 to vector<1x512xf32>
      %25 = arith.maximumf %23, %24 : vector<1x512xf32>
      %cst_17 = arith.constant 9.99999974E-6 : f32
      %26 = vector.broadcast %cst_17 : f32 to vector<1x512xf32>
      %27 = arith.addf %25, %26 : vector<1x512xf32>
      %28 = math.rsqrt %27 : vector<1x512xf32>
      %c0_18 = arith.constant 0 : index
      %c0_19 = arith.constant 0 : index
      %29 = vector.load %arg4[%c0_18, %c0_19] : memref<1x512xf32, #tpu.memory_space<vmem>>, vector<1x512xf32>
      %30 = arith.mulf %28, %29 : vector<1x512xf32>
      %c0_20 = arith.constant 0 : index
      %c0_21 = arith.constant 0 : index
      %31 = vector.load %arg5[%c0_20, %c0_21] : memref<1x512xf32, #tpu.memory_space<vmem>>, vector<1x512xf32>
      %32 = arith.mulf %16, %30 : vector<1x512xf32>
      %33 = arith.subf %31, %32 : vector<1x512xf32>
      %34 = vector.broadcast %30 : vector<1x512xf32> to vector<64x512xf32>
      %35 = arith.mulf %12, %34 : vector<64x512xf32>
      %36 = vector.broadcast %33 : vector<1x512xf32> to vector<64x512xf32>
      %37 = arith.addf %35, %36 : vector<64x512xf32>
      %c0_22 = arith.constant 0 : index
      %c0_23 = arith.constant 0 : index
      %38 = vector.load %arg6[%c0_22, %c0_23] : memref<64x512xf32, #tpu.memory_space<vmem>>, vector<64x512xf32>
      tpu.vector_store %arg6[%c0_22, %c0_23], %37 {strides = array<i32>} : memref<64x512xf32, #tpu.memory_space<vmem>>, vector<64x512xf32>,
    } else {
    }
    return
  }
  func.func @transform_0(%arg0: i32, %arg1: i32) -> (i32, i32) {
    %c0_i32 = arith.constant 0 : i32
    %c0_i32_0 = arith.constant 0 : i32
    return %c0_i32, %arg1 : i32, i32
  }
  func.func @transform_1(%arg0: i32, %arg1: i32) -> (i32, i32) {
    %c0_i32 = arith.constant 0 : i32
    return %arg0, %arg1 : i32, i32
  }
  func.func @transform_2(%arg0: i32, %arg1: i32) -> (i32, i32) {
    %c0_i32 = arith.constant 0 : i32
    %c0_i32_0 = arith.constant 0 : i32
    return %c0_i32, %arg0 : i32, i32
  }
  func.func @transform_3(%arg0: i32, %arg1: i32) -> (i32, i32) {
    %c0_i32 = arith.constant 0 : i32
    %c0_i32_0 = arith.constant 0 : i32
    return %c0_i32, %arg0 : i32, i32
  }
  func.func @transform_4(%arg0: i32, %arg1: i32) -> (i32, i32) {
    %c0_i32 = arith.constant 0 : i32
    %c0_i32_0 = arith.constant 0 : i32
    return %c0_i32, %arg0 : i32, i32
  }
}

</mosaic_0001>

<llo_original>
// kernel: batch_normalized_linear.1
$region0: #{batch_normalized_linear.1}
  #allocation0 [shape = 'u32[]', space=smem, size = 0x4, offset = 0x4, fixed_abs, tag = 'smem constant byte address 0x4 - core index']
  #allocation1 [shape = 'u32[144,128]{1,0:T(1,128)}', space=vmem, size = 0x12000, scoped, tag = 'internal scratch']
  #allocation2 [shape = 'f32[64,512]{1,0:T(8,128)}', space=vmem, size = 0x20000, scoped, tag = 'scratch operand']
  %s0 = inlined_call_operand.hbm [shape: f32[64,512], index: 0, kind: input, shape index: {}]
  %s1 = inlined_call_operand.hbm [shape: f32[512,512], index: 1, kind: input, shape index: {}]
  %s2 = inlined_call_operand.vmem [shape: f32[1,512], index: 2, kind: input, shape index: {}]
  %s3 = inlined_call_operand.vmem [shape: f32[1,512], index: 3, kind: input, shape index: {}]
  %s4 = inlined_call_operand.hbm [shape: f32[64,512], index: 4, kind: output, shape index: {}]
  %s5 = sld [smem:[#allocation0]]
  $region42: #{batch_normalized_linear.1} parent=0
    _
  %s7 = ssub.s32 1, %s5
  %s8 = scalar_select 0, %s7, %s5
  $region1: #{batch_normalized_linear.1} parent=0
    #allocation3 [shape = 'u8[131072]{0}', space=vmem, size = 0x20000, scoped, tag = 'input window, operand 0, single buffered']
    #allocation4 [shape = 's32[1]{0}', space=sflag, size = 0x4, scoped, tag = 'scoped memory for batch_normalized_linear.1']
    #allocation5 [shape = 's32[1]{0}', space=sflag, size = 0x4, scoped, tag = 'scoped memory for batch_normalized_linear.1']
    #allocation6 [shape = 'u8[1048576]{0}', space=vmem, size = 0x100000, scoped, tag = 'input window, operand 1, single buffered']
    #allocation7 [shape = 's32[1]{0}', space=sflag, size = 0x4, scoped, tag = 'scoped memory for batch_normalized_linear.1']
    #allocation8 [shape = 'u8[131072]{0}', space=vmem, size = 0x20000, scoped, tag = 'output window, operand 0, single buffered']
    %9 = vsyncpa [#allocation4], 0
    %10 = vsyncpa [#allocation7], 0
    %11 = vsyncpa [#allocation5], 0
    // Predicated region
    $region2: #{batch_normalized_linear.1} parent=1 // pred_check
      _
    $region3: #{batch_normalized_linear.1} parent=1 // pred_check_branch
      %13 = sbr.rel (0) target = $region5
    $region4: #{batch_normalized_linear.1} parent=1 // pred_region
      %s15 = ssub.s32 4096, 4096
      %16 = vsyncadd [#allocation4], %s15
      %s17 = sshll.u32 [#allocation3], 4
      %s18 = int_to_ptr.vmem [resolvable:$true] %s17
      %23 = dma.hbm_to_vmem [thread:$0]  %s0, 4096, %s18, [#allocation4], 512, 512, 32
    $region5: #{batch_normalized_linear.1} parent=1 // pred_fallthru
      _
    // Predicated region
    $region6: #{batch_normalized_linear.1} parent=1 // pred_check
      _
    $region7: #{batch_normalized_linear.1} parent=1 // pred_check_branch
      %25 = sbr.rel (0) target = $region9
    $region8: #{batch_normalized_linear.1} parent=1 // pred_region
      %s27 = ssub.s32 32768, 32768
      %28 = vsyncadd [#allocation7], %s27
      %s29 = sshll.u32 [#allocation6], 4
      %s30 = int_to_ptr.vmem [resolvable:$true] %s29
      %35 = dma.hbm_to_vmem [thread:$0]  %s1, 32768, %s30, [#allocation7], 512, 512, 32
    $region9: #{batch_normalized_linear.1} parent=1 // pred_fallthru
      _
    // Predicated region
    $region10: #{batch_normalized_linear.1} parent=1 // pred_check
      _
    $region11: #{batch_normalized_linear.1} parent=1 // pred_check_branch
      %37 = sbr.rel (0) target = $region13
    $region12: #{batch_normalized_linear.1} parent=1 // pred_region
      _
    $region13: #{batch_normalized_linear.1} parent=1 // pred_fallthru
      _
    // Predicated region
    $region14: #{batch_normalized_linear.1} parent=1 // pred_check
      _
    $region15: #{batch_normalized_linear.1} parent=1 // pred_check_branch
      %39 = sbr.rel (0) target = $region17
    $region16: #{batch_normalized_linear.1} parent=1 // pred_region
      _
    $region17: #{batch_normalized_linear.1} parent=1 // pred_fallthru
      _
    // Predicated region
    $region18: #{batch_normalized_linear.1} parent=1 // pred_check
      _
    $region19: #{batch_normalized_linear.1} parent=1 // pred_check_branch
      %41 = sbr.rel (0) target = $region21
    $region20: #{batch_normalized_linear.1} parent=1 // pred_region
      %42 = dma.done [#allocation4], 4096
    $region21: #{batch_normalized_linear.1} parent=1 // pred_fallthru
      _
    // Predicated region
    $region22: #{batch_normalized_linear.1} parent=1 // pred_check
      _
    $region23: #{batch_normalized_linear.1} parent=1 // pred_check_branch
      %44 = sbr.rel (0) target = $region25
    $region24: #{batch_normalized_linear.1} parent=1 // pred_region
      %45 = dma.done [#allocation7], 32768
    $region25: #{batch_normalized_linear.1} parent=1 // pred_fallthru
      _
    %p46 = scmp.eq.s32.totalorder 0, 0
    // Predicated region
    $region26: #{batch_normalized_linear.1} parent=1 // pred_check
      %p47 = pneg %p46
    $region27: #{batch_normalized_linear.1} parent=1 // pred_check_branch
      %49 = sbr.rel (%p47) target = $region29
    $region28: #{batch_normalized_linear.1} parent=1 // pred_region
      %50 = vst [vmem:[#allocation2] sm:$0xff] 0.0
      %51 = vst [vmem:[#allocation2 + $0x8] sm:$0xff] 0.0
      %52 = vst [vmem:[#allocation2 + $0x10] sm:$0xff] 0.0
      %53 = vst [vmem:[#allocation2 + $0x18] sm:$0xff] 0.0
      %54 = vst [vmem:[#allocation2 + $0x20] sm:$0xff] 0.0
      %55 = vst [vmem:[#allocation2 + $0x28] sm:$0xff] 0.0
      %56 = vst [vmem:[#allocation2 + $0x30] sm:$0xff] 0.0
      %57 = vst [vmem:[#allocation2 + $0x38] sm:$0xff] 0.0
      %58 = vst [vmem:[#allocation2 + $0x40] sm:$0xff] 0.0
      %59 = vst [vmem:[#allocation2 + $0x48] sm:$0xff] 0.0
      %60 = vst [vmem:[#allocation2 + $0x50] sm:$0xff] 0.0
      %61 = vst [vmem:[#allocation2 + $0x58] sm:$0xff] 0.0
      %62 = vst [vmem:[#allocation2 + $0x60] sm:$0xff] 0.0
      %63 = vst [vmem:[#allocation2 + $0x68] sm:$0xff] 0.0
      %64 = vst [vmem:[#allocation2 + $0x70] sm:$0xff] 0.0
      %65 = vst [vmem:[#allocation2 + $0x78] sm:$0xff] 0.0
      %66 = vst [vmem:[#allocation2 + $0x80] sm:$0xff] 0.0
      %67 = vst [vmem:[#allocation2 + $0x88] sm:$0xff] 0.0
      %68 = vst [vmem:[#allocation2 + $0x90] sm:$0xff] 0.0
      %69 = vst [vmem:[#allocation2 + $0x98] sm:$0xff] 0.0
      %70 = vst [vmem:[#allocation2 + $0xa0] sm:$0xff] 0.0
      %71 = vst [vmem:[#allocation2 + $0xa8] sm:$0xff] 0.0
      %72 = vst [vmem:[#allocation2 + $0xb0] sm:$0xff] 0.0
      %73 = vst [vmem:[#allocation2 + $0xb8] sm:$0xff] 0.0
      %74 = vst [vmem:[#allocation2 + $0xc0] sm:$0xff] 0.0
      %75 = vst [vmem:[#allocation2 + $0xc8] sm:$0xff] 0.0
      %76 = vst [vmem:[#allocation2 + $0xd0] sm:$0xff] 0.0
      %77 = vst [vmem:[#allocation2 + $0xd8] sm:$0xff] 0.0
      %78 = vst [vmem:[#allocation2 + $0xe0] sm:$0xff] 0.0
      %79 = vst [vmem:[#allocation2 + $0xe8] sm:$0xff] 0.0
      %80 = vst [vmem:[#allocation2 + $0xf0] sm:$0xff] 0.0
      %81 = vst [vmem:[#allocation2 + $0xf8] sm:$0xff] 0.0
    $region29: #{batch_normalized_linear.1} parent=1 // pred_fallthru
      _
    %v82 = vld [vmem:[#allocation2] sm:$0xff]
    %v83 = vld [vmem:[#allocation2 + $0x8] sm:$0xff]
    %v84 = vld [vmem:[#allocation2 + $0x10] sm:$0xff]
    %v85 = vld [vmem:[#allocation2 + $0x18] sm:$0xff]
    %v86 = vld [vmem:[#allocation2 + $0x20] sm:$0xff]
    %v87 = vld [vmem:[#allocation2 + $0x28] sm:$0xff]
    %v88 = vld [vmem:[#allocation2 + $0x30] sm:$0xff]
    %v89 = vld [vmem:[#allocation2 + $0x38] sm:$0xff]
    %v90 = vld [vmem:[#allocation2 + $0x40] sm:$0xff]
    %v91 = vld [vmem:[#allocation2 + $0x48] sm:$0xff]
    %v92 = vld [vmem:[#allocation2 + $0x50] sm:$0xff]
    %v93 = vld [vmem:[#allocation2 + $0x58] sm:$0xff]
    %v94 = vld [vmem:[#allocation2 + $0x60] sm:$0xff]
    %v95 = vld [vmem:[#allocation2 + $0x68] sm:$0xff]
    %v96 = vld [vmem:[#allocation2 + $0x70] sm:$0xff]
    %v97 = vld [vmem:[#allocation2 + $0x78] sm:$0xff]
    %v98 = vld [vmem:[#allocation2 + $0x80] sm:$0xff]
    %v99 = vld [vmem:[#allocation2 + $0x88] sm:$0xff]
    %v100 = vld [vmem:[#allocation2 + $0x90] sm:$0xff]
    %v101 = vld [vmem:[#allocation2 + $0x98] sm:$0xff]
    %v102 = vld [vmem:[#allocation2 + $0xa0] sm:$0xff]
    %v103 = vld [vmem:[#allocation2 + $0xa8] sm:$0xff]
    %v104 = vld [vmem:[#allocation2 + $0xb0] sm:$0xff]
    %v105 = vld [vmem:[#allocation2 + $0xb8] sm:$0xff]
    %v106 = vld [vmem:[#allocation2 + $0xc0] sm:$0xff]
    %v107 = vld [vmem:[#allocation2 + $0xc8] sm:$0xff]
    %v108 = vld [vmem:[#allocation2 + $0xd0] sm:$0xff]
    %v109 = vld [vmem:[#allocation2 + $0xd8] sm:$0xff]
    %v110 = vld [vmem:[#allocation2 + $0xe0] sm:$0xff]
    %v111 = vld [vmem:[#allocation2 + $0xe8] sm:$0xff]
    %v112 = vld [vmem:[#allocation2 + $0xf0] sm:$0xff]
    %v113 = vld [vmem:[#allocation2 + $0xf8] sm:$0xff]
    %v114 = vld [vmem:[#allocation3] sm:$0xff]
    %v115 = vld [vmem:[#allocation3 + $0x8] sm:$0xff]
    %v116 = vld [vmem:[#allocation3 + $0x10] sm:$0xff]
    %v117 = vld [vmem:[#allocation3 + $0x18] sm:$0xff]
    %v118 = vld [vmem:[#allocation3 + $0x20] sm:$0xff]
    %v119 = vld [vmem:[#allocation3 + $0x28] sm:$0xff]
    %v120 = vld [vmem:[#allocation3 + $0x30] sm:$0xff]
    %v121 = vld [vmem:[#allocation3 + $0x38] sm:$0xff]
    %v122 = vld [vmem:[#allocation3 + $0x40] sm:$0xff]
    %v123 = vld [vmem:[#allocation3 + $0x48] sm:$0xff]
    %v124 = vld [vmem:[#allocation3 + $0x50] sm:$0xff]
    %v125 = vld [vmem:[#allocation3 + $0x58] sm:$0xff]
    %v126 = vld [vmem:[#allocation3 + $0x60] sm:$0xff]
    %v127 = vld [vmem:[#allocation3 + $0x68] sm:$0xff]
    %v128 = vld [vmem:[#allocation3 + $0x70] sm:$0xff]
    %v129 = vld [vmem:[#allocation3 + $0x78] sm:$0xff]
    %v130 = vld [vmem:[#allocation3 + $0x80] sm:$0xff]
    %v131 = vld [vmem:[#allocation3 + $0x88] sm:$0xff]
    %v132 = vld [vmem:[#allocation3 + $0x90] sm:$0xff]
    %v133 = vld [vmem:[#allocation3 + $0x98] sm:$0xff]
    %v134 = vld [vmem:[#allocation3 + $0xa0] sm:$0xff]
    %v135 = vld [vmem:[#allocation3 + $0xa8] sm:$0xff]
    %v136 = vld [vmem:[#allocation3 + $0xb0] sm:$0xff]
    %v137 = vld [vmem:[#allocation3 + $0xb8] sm:$0xff]
    %v138 = vld [vmem:[#allocation3 + $0xc0] sm:$0xff]
    %v139 = vld [vmem:[#allocation3 + $0xc8] sm:$0xff]
    %v140 = vld [vmem:[#allocation3 + $0xd0] sm:$0xff]
    %v141 = vld [vmem:[#allocation3 + $0xd8] sm:$0xff]
    %v142 = vld [vmem:[#allocation3 + $0xe0] sm:$0xff]
    %v143 = vld [vmem:[#allocation3 + $0xe8] sm:$0xff]
    %v144 = vld [vmem:[#allocation3 + $0xf0] sm:$0xff]
    %v145 = vld [vmem:[#allocation3 + $0xf8] sm:$0xff]
    %v146 = vld [vmem:[#allocation6] sm:$0xff]
    %v147 = vld [vmem:[#allocation6 + $0x8] sm:$0xff]
    %v148 = vld [vmem:[#allocation6 + $0x10] sm:$0xff]
    %v149 = vld [vmem:[#allocation6 + $0x18] sm:$0xff]
    %v150 = vld [vmem:[#allocation6 + $0x20] sm:$0xff]
    %v151 = vld [vmem:[#allocation6 + $0x28] sm:$0xff]
    %v152 = vld [vmem:[#allocation6 + $0x30] sm:$0xff]
    %v153 = vld [vmem:[#allocation6 + $0x38] sm:$0xff]
    %v154 = vld [vmem:[#allocation6 + $0x40] sm:$0xff]
    %v155 = vld [vmem:[#allocation6 + $0x48] sm:$0xff]
    %v156 = vld [vmem:[#allocation6 + $0x50] sm:$0xff]
    %v157 = vld [vmem:[#allocation6 + $0x58] sm:$0xff]
    %v158 = vld [vmem:[#allocation6 + $0x60] sm:$0xff]
    %v159 = vld [vmem:[#allocation6 + $0x68] sm:$0xff]
    %v160 = vld [vmem:[#allocation6 + $0x70] sm:$0xff]
    %v161 = vld [vmem:[#allocation6 + $0x78] sm:$0xff]
    %v162 = vld [vmem:[#allocation6 + $0x80] sm:$0xff]
    %v163 = vld [vmem:[#allocation6 + $0x88] sm:$0xff]
    %v164 = vld [vmem:[#allocation6 + $0x90] sm:$0xff]
    %v165 = vld [vmem:[#allocation6 + $0x98] sm:$0xff]
    %v166 = vld [vmem:[#allocation6 + $0xa0] sm:$0xff]
    %v167 = vld [vmem:[#allocation6 + $0xa8] sm:$0xff]
    %v168 = vld [vmem:[#allocation6 + $0xb0] sm:$0xff]
    %v169 = vld [vmem:[#allocation6 + $0xb8] sm:$0xff]
    %v170 = vld [vmem:[#allocation6 + $0xc0] sm:$0xff]
    %v171 = vld [vmem:[#allocation6 + $0xc8] sm:$0xff]
    %v172 = vld [vmem:[#allocation6 + $0xd0] sm:$0xff]
    %v173 = vld [vmem:[#allocation6 + $0xd8] sm:$0xff]
    %v174 = vld [vmem:[#allocation6 + $0xe0] sm:$0xff]
    %v175 = vld [vmem:[#allocation6 + $0xe8] sm:$0xff]
    %v176 = vld [vmem:[#allocation6 + $0xf0] sm:$0xff]
    %v177 = vld [vmem:[#allocation6 + $0xf8] sm:$0xff]
    %v178 = vld [vmem:[#allocation6 + $0x100] sm:$0xff]
    %v179 = vld [vmem:[#allocation6 + $0x108] sm:$0xff]
    %v180 = vld [vmem:[#allocation6 + $0x110] sm:$0xff]
    %v181 = vld [vmem:[#allocation6 + $0x118] sm:$0xff]
    %v182 = vld [vmem:[#allocation6 + $0x120] sm:$0xff]
    %v183 = vld [vmem:[#allocation6 + $0x128] sm:$0xff]
    %v184 = vld [vmem:[#allocation6 + $0x130] sm:$0xff]
    %v185 = vld [vmem:[#allocation6 + $0x138] sm:$0xff]
    %v186 = vld [vmem:[#allocation6 + $0x140] sm:$0xff]
    %v187 = vld [vmem:[#allocation6 + $0x148] sm:$0xff]
    %v188 = vld [vmem:[#allocation6 + $0x150] sm:$0xff]
    %v189 = vld [vmem:[#allocation6 + $0x158] sm:$0xff]
    %v190 = vld [vmem:[#allocation6 + $0x160] sm:$0xff]
    %v191 = vld [vmem:[#allocation6 + $0x168] sm:$0xff]
    %v192 = vld [vmem:[#allocation6 + $0x170] sm:$0xff]
    %v193 = vld [vmem:[#allocation6 + $0x178] sm:$0xff]
    %v194 = vld [vmem:[#allocation6 + $0x180] sm:$0xff]
    %v195 = vld [vmem:[#allocation6 + $0x188] sm:$0xff]
    %v196 = vld [vmem:[#allocation6 + $0x190] sm:$0xff]
    %v197 = vld [vmem:[#allocation6 + $0x198] sm:$0xff]
    %v198 = vld [vmem:[#allocation6 + $0x1a0] sm:$0xff]
    %v199 = vld [vmem:[#allocation6 + $0x1a8] sm:$0xff]
    %v200 = vld [vmem:[#allocation6 + $0x1b0] sm:$0xff]
    %v201 = vld [vmem:[#allocation6 + $0x1b8] sm:$0xff]
    %v202 = vld [vmem:[#allocation6 + $0x1c0] sm:$0xff]
    %v203 = vld [vmem:[#allocation6 + $0x1c8] sm:$0xff]
    %v204 = vld [vmem:[#allocation6 + $0x1d0] sm:$0xff]
    %v205 = vld [vmem:[#allocation6 + $0x1d8] sm:$0xff]
    %v206 = vld [vmem:[#allocation6 + $0x1e0] sm:$0xff]
    %v207 = vld [vmem:[#allocation6 + $0x1e8] sm:$0xff]
    %v208 = vld [vmem:[#allocation6 + $0x1f0] sm:$0xff]
    %v209 = vld [vmem:[#allocation6 + $0x1f8] sm:$0xff]
    %v210 = vld [vmem:[#allocation6 + $0x200] sm:$0xff]
    %v211 = vld [vmem:[#allocation6 + $0x208] sm:$0xff]
    %v212 = vld [vmem:[#allocation6 + $0x210] sm:$0xff]
    %v213 = vld [vmem:[#allocation6 + $0x218] sm:$0xff]
    %v214 = vld [vmem:[#allocation6 + $0x220] sm:$0xff]
    %v215 = vld [vmem:[#allocation6 + $0x228] sm:$0xff]
    %v216 = vld [vmem:[#allocation6 + $0x230] sm:$0xff]
    %v217 = vld [vmem:[#allocation6 + $0x238] sm:$0xff]
    %v218 = vld [vmem:[#allocation6 + $0x240] sm:$0xff]
    %v219 = vld [vmem:[#allocation6 + $0x248] sm:$0xff]
    %v220 = vld [vmem:[#allocation6 + $0x250] sm:$0xff]
    %v221 = vld [vmem:[#allocation6 + $0x258] sm:$0xff]
    %v222 = vld [vmem:[#allocation6 + $0x260] sm:$0xff]
    %v223 = vld [vmem:[#allocation6 + $0x268] sm:$0xff]
    %v224 = vld [vmem:[#allocation6 + $0x270] sm:$0xff]
    %v225 = vld [vmem:[#allocation6 + $0x278] sm:$0xff]
    %v226 = vld [vmem:[#allocation6 + $0x280] sm:$0xff]
    %v227 = vld [vmem:[#allocation6 + $0x288] sm:$0xff]
    %v228 = vld [vmem:[#allocation6 + $0x290] sm:$0xff]
    %v229 = vld [vmem:[#allocation6 + $0x298] sm:$0xff]
    %v230 = vld [vmem:[#allocation6 + $0x2a0] sm:$0xff]
    %v231 = vld [vmem:[#allocation6 + $0x2a8] sm:$0xff]
    %v232 = vld [vmem:[#allocation6 + $0x2b0] sm:$0xff]
    %v233 = vld [vmem:[#allocation6 + $0x2b8] sm:$0xff]
    %v234 = vld [vmem:[#allocation6 + $0x2c0] sm:$0xff]
    %v235 = vld [vmem:[#allocation6 + $0x2c8] sm:$0xff]
    %v236 = vld [vmem:[#allocation6 + $0x2d0] sm:$0xff]
    %v237 = vld [vmem:[#allocation6 + $0x2d8] sm:$0xff]
    %v238 = vld [vmem:[#allocation6 + $0x2e0] sm:$0xff]
    %v239 = vld [vmem:[#allocation6 + $0x2e8] sm:$0xff]
    %v240 = vld [vmem:[#allocation6 + $0x2f0] sm:$0xff]
    %v241 = vld [vmem:[#allocation6 + $0x2f8] sm:$0xff]
    %v242 = vld [vmem:[#allocation6 + $0x300] sm:$0xff]
    %v243 = vld [vmem:[#allocation6 + $0x308] sm:$0xff]
    %v244 = vld [vmem:[#allocation6 + $0x310] sm:$0xff]
    %v245 = vld [vmem:[#allocation6 + $0x318] sm:$0xff]
    %v246 = vld [vmem:[#allocation6 + $0x320] sm:$0xff]
    %v247 = vld [vmem:[#allocation6 + $0x328] sm:$0xff]
    %v248 = vld [vmem:[#allocation6 + $0x330] sm:$0xff]
    %v249 = vld [vmem:[#allocation6 + $0x338] sm:$0xff]
    %v250 = vld [vmem:[#allocation6 + $0x340] sm:$0xff]
    %v251 = vld [vmem:[#allocation6 + $0x348] sm:$0xff]
    %v252 = vld [vmem:[#allocation6 + $0x350] sm:$0xff]
    %v253 = vld [vmem:[#allocation6 + $0x358] sm:$0xff]
    %v254 = vld [vmem:[#allocation6 + $0x360] sm:$0xff]
    %v255 = vld [vmem:[#allocation6 + $0x368] sm:$0xff]
    %v256 = vld [vmem:[#allocation6 + $0x370] sm:$0xff]
    %v257 = vld [vmem:[#allocation6 + $0x378] sm:$0xff]
    %v258 = vld [vmem:[#allocation6 + $0x380] sm:$0xff]
    %v259 = vld [vmem:[#allocation6 + $0x388] sm:$0xff]
    %v260 = vld [vmem:[#allocation6 + $0x390] sm:$0xff]
    %v261 = vld [vmem:[#allocation6 + $0x398] sm:$0xff]
    %v262 = vld [vmem:[#allocation6 + $0x3a0] sm:$0xff]
    %v263 = vld [vmem:[#allocation6 + $0x3a8] sm:$0xff]
    %v264 = vld [vmem:[#allocation6 + $0x3b0] sm:$0xff]
    %v265 = vld [vmem:[#allocation6 + $0x3b8] sm:$0xff]
    %v266 = vld [vmem:[#allocation6 + $0x3c0] sm:$0xff]
    %v267 = vld [vmem:[#allocation6 + $0x3c8] sm:$0xff]
    %v268 = vld [vmem:[#allocation6 + $0x3d0] sm:$0xff]
    %v269 = vld [vmem:[#allocation6 + $0x3d8] sm:$0xff]
    %v270 = vld [vmem:[#allocation6 + $0x3e0] sm:$0xff]
    %v271 = vld [vmem:[#allocation6 + $0x3e8] sm:$0xff]
    %v272 = vld [vmem:[#allocation6 + $0x3f0] sm:$0xff]
    %v273 = vld [vmem:[#allocation6 + $0x3f8] sm:$0xff]
    %v274 = vld [vmem:[#allocation6 + $0x400] sm:$0xff]
    %v275 = vld [vmem:[#allocation6 + $0x408] sm:$0xff]
    %v276 = vld [vmem:[#allocation6 + $0x410] sm:$0xff]
    %v277 = vld [vmem:[#allocation6 + $0x418] sm:$0xff]
    %v278 = vld [vmem:[#allocation6 + $0x420] sm:$0xff]
    %v279 = vld [vmem:[#allocation6 + $0x428] sm:$0xff]
    %v280 = vld [vmem:[#allocation6 + $0x430] sm:$0xff]
    %v281 = vld [vmem:[#allocation6 + $0x438] sm:$0xff]
    %v282 = vld [vmem:[#allocation6 + $0x440] sm:$0xff]
    %v283 = vld [vmem:[#allocation6 + $0x448] sm:$0xff]
    %v284 = vld [vmem:[#allocation6 + $0x450] sm:$0xff]
    %v285 = vld [vmem:[#allocation6 + $0x458] sm:$0xff]
    %v286 = vld [vmem:[#allocation6 + $0x460] sm:$0xff]
    %v287 = vld [vmem:[#allocation6 + $0x468] sm:$0xff]
    %v288 = vld [vmem:[#allocation6 + $0x470] sm:$0xff]
    %v289 = vld [vmem:[#allocation6 + $0x478] sm:$0xff]
    %v290 = vld [vmem:[#allocation6 + $0x480] sm:$0xff]
    %v291 = vld [vmem:[#allocation6 + $0x488] sm:$0xff]
    %v292 = vld [vmem:[#allocation6 + $0x490] sm:$0xff]
    %v293 = vld [vmem:[#allocation6 + $0x498] sm:$0xff]
    %v294 = vld [vmem:[#allocation6 + $0x4a0] sm:$0xff]
    %v295 = vld [vmem:[#allocation6 + $0x4a8] sm:$0xff]
    %v296 = vld [vmem:[#allocation6 + $0x4b0] sm:$0xff]
    %v297 = vld [vmem:[#allocation6 + $0x4b8] sm:$0xff]
    %v298 = vld [vmem:[#allocation6 + $0x4c0] sm:$0xff]
    %v299 = vld [vmem:[#allocation6 + $0x4c8] sm:$0xff]
    %v300 = vld [vmem:[#allocation6 + $0x4d0] sm:$0xff]
    %v301 = vld [vmem:[#allocation6 + $0x4d8] sm:$0xff]
    %v302 = vld [vmem:[#allocation6 + $0x4e0] sm:$0xff]
    %v303 = vld [vmem:[#allocation6 + $0x4e8] sm:$0xff]
    %v304 = vld [vmem:[#allocation6 + $0x4f0] sm:$0xff]
    %v305 = vld [vmem:[#allocation6 + $0x4f8] sm:$0xff]
    %v306 = vld [vmem:[#allocation6 + $0x500] sm:$0xff]
    %v307 = vld [vmem:[#allocation6 + $0x508] sm:$0xff]
    %v308 = vld [vmem:[#allocation6 + $0x510] sm:$0xff]
    %v309 = vld [vmem:[#allocation6 + $0x518] sm:$0xff]
    %v310 = vld [vmem:[#allocation6 + $0x520] sm:$0xff]
    %v311 = vld [vmem:[#allocation6 + $0x528] sm:$0xff]
    %v312 = vld [vmem:[#allocation6 + $0x530] sm:$0xff]
    %v313 = vld [vmem:[#allocation6 + $0x538] sm:$0xff]
    %v314 = vld [vmem:[#allocation6 + $0x540] sm:$0xff]
    %v315 = vld [vmem:[#allocation6 + $0x548] sm:$0xff]
    %v316 = vld [vmem:[#allocation6 + $0x550] sm:$0xff]
    %v317 = vld [vmem:[#allocation6 + $0x558] sm:$0xff]
    %v318 = vld [vmem:[#allocation6 + $0x560] sm:$0xff]
    %v319 = vld [vmem:[#allocation6 + $0x568] sm:$0xff]
    %v320 = vld [vmem:[#allocation6 + $0x570] sm:$0xff]
    %v321 = vld [vmem:[#allocation6 + $0x578] sm:$0xff]
    %v322 = vld [vmem:[#allocation6 + $0x580] sm:$0xff]
    %v323 = vld [vmem:[#allocation6 + $0x588] sm:$0xff]
    %v324 = vld [vmem:[#allocation6 + $0x590] sm:$0xff]
    %v325 = vld [vmem:[#allocation6 + $0x598] sm:$0xff]
    %v326 = vld [vmem:[#allocation6 + $0x5a0] sm:$0xff]
    %v327 = vld [vmem:[#allocation6 + $0x5a8] sm:$0xff]
    %v328 = vld [vmem:[#allocation6 + $0x5b0] sm:$0xff]
    %v329 = vld [vmem:[#allocation6 + $0x5b8] sm:$0xff]
    %v330 = vld [vmem:[#allocation6 + $0x5c0] sm:$0xff]
    %v331 = vld [vmem:[#allocation6 + $0x5c8] sm:$0xff]
    %v332 = vld [vmem:[#allocation6 + $0x5d0] sm:$0xff]
    %v333 = vld [vmem:[#allocation6 + $0x5d8] sm:$0xff]
    %v334 = vld [vmem:[#allocation6 + $0x5e0] sm:$0xff]
    %v335 = vld [vmem:[#allocation6 + $0x5e8] sm:$0xff]
    %v336 = vld [vmem:[#allocation6 + $0x5f0] sm:$0xff]
    %v337 = vld [vmem:[#allocation6 + $0x5f8] sm:$0xff]
    %v338 = vld [vmem:[#allocation6 + $0x600] sm:$0xff]
    %v339 = vld [vmem:[#allocation6 + $0x608] sm:$0xff]
    %v340 = vld [vmem:[#allocation6 + $0x610] sm:$0xff]
    %v341 = vld [vmem:[#allocation6 + $0x618] sm:$0xff]
    %v342 = vld [vmem:[#allocation6 + $0x620] sm:$0xff]
    %v343 = vld [vmem:[#allocation6 + $0x628] sm:$0xff]
    %v344 = vld [vmem:[#allocation6 + $0x630] sm:$0xff]
    %v345 = vld [vmem:[#allocation6 + $0x638] sm:$0xff]
    %v346 = vld [vmem:[#allocation6 + $0x640] sm:$0xff]
    %v347 = vld [vmem:[#allocation6 + $0x648] sm:$0xff]
    %v348 = vld [vmem:[#allocation6 + $0x650] sm:$0xff]
    %v349 = vld [vmem:[#allocation6 + $0x658] sm:$0xff]
    %v350 = vld [vmem:[#allocation6 + $0x660] sm:$0xff]
    %v351 = vld [vmem:[#allocation6 + $0x668] sm:$0xff]
    %v352 = vld [vmem:[#allocation6 + $0x670] sm:$0xff]
    %v353 = vld [vmem:[#allocation6 + $0x678] sm:$0xff]
    %v354 = vld [vmem:[#allocation6 + $0x680] sm:$0xff]
    %v355 = vld [vmem:[#allocation6 + $0x688] sm:$0xff]
    %v356 = vld [vmem:[#allocation6 + $0x690] sm:$0xff]
    %v357 = vld [vmem:[#allocation6 + $0x698] sm:$0xff]
    %v358 = vld [vmem:[#allocation6 + $0x6a0] sm:$0xff]
    %v359 = vld [vmem:[#allocation6 + $0x6a8] sm:$0xff]
    %v360 = vld [vmem:[#allocation6 + $0x6b0] sm:$0xff]
    %v361 = vld [vmem:[#allocation6 + $0x6b8] sm:$0xff]
    %v362 = vld [vmem:[#allocation6 + $0x6c0] sm:$0xff]
    %v363 = vld [vmem:[#allocation6 + $0x6c8] sm:$0xff]
    %v364 = vld [vmem:[#allocation6 + $0x6d0] sm:$0xff]
    %v365 = vld [vmem:[#allocation6 + $0x6d8] sm:$0xff]
    %v366 = vld [vmem:[#allocation6 + $0x6e0] sm:$0xff]
    %v367 = vld [vmem:[#allocation6 + $0x6e8] sm:$0xff]
    %v368 = vld [vmem:[#allocation6 + $0x6f0] sm:$0xff]
    %v369 = vld [vmem:[#allocation6 + $0x6f8] sm:$0xff]
    %v370 = vld [vmem:[#allocation6 + $0x700] sm:$0xff]
    %v371 = vld [vmem:[#allocation6 + $0x708] sm:$0xff]
    %v372 = vld [vmem:[#allocation6 + $0x710] sm:$0xff]
    %v373 = vld [vmem:[#allocation6 + $0x718] sm:$0xff]
    %v374 = vld [vmem:[#allocation6 + $0x720] sm:$0xff]
    %v375 = vld [vmem:[#allocation6 + $0x728] sm:$0xff]
    %v376 = vld [vmem:[#allocation6 + $0x730] sm:$0xff]
    %v377 = vld [vmem:[#allocation6 + $0x738] sm:$0xff]
    %v378 = vld [vmem:[#allocation6 + $0x740] sm:$0xff]
    %v379 = vld [vmem:[#allocation6 + $0x748] sm:$0xff]
    %v380 = vld [vmem:[#allocation6 + $0x750] sm:$0xff]
    %v381 = vld [vmem:[#allocation6 + $0x758] sm:$0xff]
    %v382 = vld [vmem:[#allocation6 + $0x760] sm:$0xff]
    %v383 = vld [vmem:[#allocation6 + $0x768] sm:$0xff]
    %v384 = vld [vmem:[#allocation6 + $0x770] sm:$0xff]
    %v385 = vld [vmem:[#allocation6 + $0x778] sm:$0xff]
    %v386 = vld [vmem:[#allocation6 + $0x780] sm:$0xff]
    %v387 = vld [vmem:[#allocation6 + $0x788] sm:$0xff]
    %v388 = vld [vmem:[#allocation6 + $0x790] sm:$0xff]
    %v389 = vld [vmem:[#allocation6 + $0x798] sm:$0xff]
    %v390 = vld [vmem:[#allocation6 + $0x7a0] sm:$0xff]
    %v391 = vld [vmem:[#allocation6 + $0x7a8] sm:$0xff]
    %v392 = vld [vmem:[#allocation6 + $0x7b0] sm:$0xff]
    %v393 = vld [vmem:[#allocation6 + $0x7b8] sm:$0xff]
    %v394 = vld [vmem:[#allocation6 + $0x7c0] sm:$0xff]
    %v395 = vld [vmem:[#allocation6 + $0x7c8] sm:$0xff]
    %v396 = vld [vmem:[#allocation6 + $0x7d0] sm:$0xff]
    %v397 = vld [vmem:[#allocation6 + $0x7d8] sm:$0xff]
    %v398 = vld [vmem:[#allocation6 + $0x7e0] sm:$0xff]
    %v399 = vld [vmem:[#allocation6 + $0x7e8] sm:$0xff]
    %v400 = vld [vmem:[#allocation6 + $0x7f0] sm:$0xff]
    %v401 = vld [vmem:[#allocation6 + $0x7f8] sm:$0xff]
    %402 = vmatprep.subr.mxu0 %v207
    %403 = vmatpush1.xpose.msra.mxu0 %v206
    %404 = vmatprep.subr.mxu0 %v203
    %405 = vmatpush1.xpose.msra.mxu0 %v202
    %406 = vmatprep.subr.mxu0 %v199
    %407 = vmatpush1.xpose.msra.mxu0 %v198
    %408 = vmatprep.subr.mxu0 %v195
    %409 = vmatpush1.xpose.msra.mxu0 %v194
    %410 = vmatprep.subr.mxu0 %v191
    %411 = vmatpush1.xpose.msra.mxu0 %v190
    %412 = vmatprep.subr.mxu0 %v187
    %413 = vmatpush1.xpose.msra.mxu0 %v186
    %414 = vmatprep.subr.mxu0 %v183
    %415 = vmatpush1.xpose.msra.mxu0 %v182
    %416 = vmatprep.subr.mxu0 %v179
    %417 = vmatpush1.xpose.msra.mxu0 %v178
    %418 = vmatprep.subr.mxu0 %v175
    %419 = vmatpush1.xpose.msra.mxu0 %v174
    %420 = vmatprep.subr.mxu0 %v171
    %421 = vmatpush1.xpose.msra.mxu0 %v170
    %422 = vmatprep.subr.mxu0 %v167
    %423 = vmatpush1.xpose.msra.mxu0 %v166
    %424 = vmatprep.subr.mxu0 %v163
    %425 = vmatpush1.xpose.msra.mxu0 %v162
    %426 = vmatprep.subr.mxu0 %v159
    %427 = vmatpush1.xpose.msra.mxu0 %v158
    %428 = vmatprep.subr.mxu0 %v155
    %429 = vmatpush1.xpose.msra.mxu0 %v154
    %430 = vmatprep.subr.mxu0 %v151
    %431 = vmatpush1.xpose.msra.mxu0 %v150
    %432 = vmatprep.subr.mxu0 %v147
    %433 = vmatpush1.xpose.msra.mxu0 %v146
    %434 = vmatprep.subr.mxu0 %v271
    %435 = vmatpush2.xpose.msra.mxu0 %v270
    %436 = vmatprep.subr.mxu0 %v267
    %437 = vmatpush2.xpose.msra.mxu0 %v266
    %438 = vmatprep.subr.mxu0 %v263
    %439 = vmatpush2.xpose.msra.mxu0 %v262
    %440 = vmatprep.subr.mxu0 %v259
    %441 = vmatpush2.xpose.msra.mxu0 %v258
    %442 = vmatprep.subr.mxu0 %v255
    %443 = vmatpush2.xpose.msra.mxu0 %v254
    %444 = vmatprep.subr.mxu0 %v251
    %445 = vmatpush2.xpose.msra.mxu0 %v250
    %446 = vmatprep.subr.mxu0 %v247
    %447 = vmatpush2.xpose.msra.mxu0 %v246
    %448 = vmatprep.subr.mxu0 %v243
    %449 = vmatpush2.xpose.msra.mxu0 %v242
    %450 = vmatprep.subr.mxu0 %v239
    %451 = vmatpush2.xpose.msra.mxu0 %v238
    %452 = vmatprep.subr.mxu0 %v235
    %453 = vmatpush2.xpose.msra.mxu0 %v234
    %454 = vmatprep.subr.mxu0 %v231
    %455 = vmatpush2.xpose.msra.mxu0 %v230
    %456 = vmatprep.subr.mxu0 %v227
    %457 = vmatpush2.xpose.msra.mxu0 %v226
    %458 = vmatprep.subr.mxu0 %v223
    %459 = vmatpush2.xpose.msra.mxu0 %v222
    %460 = vmatprep.subr.mxu0 %v219
    %461 = vmatpush2.xpose.msra.mxu0 %v218
    %462 = vmatprep.subr.mxu0 %v215
    %463 = vmatpush2.xpose.msra.mxu0 %v214
    %464 = vmatprep.subr.mxu0 %v211
    %465 = vmatpush2.xpose.msra.mxu0 %v210
    %466 = vmatprep.mubr.f32.mxu0 %v115
    %467 = vmatmul.mubr.f32.gmra.mxu0 %v114
    %v468 = vpop.f32.mrf.mxu0
    %v469 = vadd.f32 0.0, %v468
    %v470 = vpop.f32.mrf.mxu0
    %v471 = vadd.f32 0.0, %v470
    %472 = vmatprep.mubr.f32.mxu0 %v119
    %473 = vmatmul.mubr.f32.gmra.mxu0 %v118
    %v474 = vpop.f32.mrf.mxu0
    %v475 = vadd.f32 0.0, %v474
    %v476 = vpop.f32.mrf.mxu0
    %v477 = vadd.f32 0.0, %v476
    %478 = vmatprep.mubr.f32.mxu0 %v123
    %479 = vmatmul.mubr.f32.gmra.mxu0 %v122
    %v480 = vpop.f32.mrf.mxu0
    %v481 = vadd.f32 0.0, %v480
    %v482 = vpop.f32.mrf.mxu0
    %v483 = vadd.f32 0.0, %v482
    %484 = vmatprep.mubr.f32.mxu0 %v127
    %485 = vmatmul.mubr.f32.gmra.mxu0 %v126
    %v486 = vpop.f32.mrf.mxu0
    %v487 = vadd.f32 0.0, %v486
    %v488 = vpop.f32.mrf.mxu0
    %v489 = vadd.f32 0.0, %v488
    %490 = vmatprep.mubr.f32.mxu0 %v131
    %491 = vmatmul.mubr.f32.gmra.mxu0 %v130
    %v492 = vpop.f32.mrf.mxu0
    %v493 = vadd.f32 0.0, %v492
    %v494 = vpop.f32.mrf.mxu0
    %v495 = vadd.f32 0.0, %v494
    %496 = vmatprep.mubr.f32.mxu0 %v135
    %497 = vmatmul.mubr.f32.gmra.mxu0 %v134
    %v498 = vpop.f32.mrf.mxu0
    %v499 = vadd.f32 0.0, %v498
    %v500 = vpop.f32.mrf.mxu0
    %v501 = vadd.f32 0.0, %v500
    %502 = vmatprep.mubr.f32.mxu0 %v139
    %503 = vmatmul.mubr.f32.gmra.mxu0 %v138
    %v504 = vpop.f32.mrf.mxu0
    %v505 = vadd.f32 0.0, %v504
    %v506 = vpop.f32.mrf.mxu0
    %v507 = vadd.f32 0.0, %v506
    %508 = vmatprep.mubr.f32.mxu0 %v143
    %509 = vmatmul.mubr.f32.gmra.mxu0 %v142
    %v510 = vpop.f32.mrf.mxu0
    %v511 = vadd.f32 0.0, %v510
    %v512 = vpop.f32.mrf.mxu0
    %v513 = vadd.f32 0.0, %v512
    %514 = vdwg.mxu0
    %515 = vmatprep.subr.mxu0 %v209
    %516 = vmatpush1.xpose.msra.mxu0 %v208
    %517 = vmatprep.subr.mxu0 %v205
    %518 = vmatpush1.xpose.msra.mxu0 %v204
    %519 = vmatprep.subr.mxu0 %v201
    %520 = vmatpush1.xpose.msra.mxu0 %v200
    %521 = vmatprep.subr.mxu0 %v197
    %522 = vmatpush1.xpose.msra.mxu0 %v196
    %523 = vmatprep.subr.mxu0 %v193
    %524 = vmatpush1.xpose.msra.mxu0 %v192
    %525 = vmatprep.subr.mxu0 %v189
    %526 = vmatpush1.xpose.msra.mxu0 %v188
    %527 = vmatprep.subr.mxu0 %v185
    %528 = vmatpush1.xpose.msra.mxu0 %v184
    %529 = vmatprep.subr.mxu0 %v181
    %530 = vmatpush1.xpose.msra.mxu0 %v180
    %531 = vmatprep.subr.mxu0 %v177
    %532 = vmatpush1.xpose.msra.mxu0 %v176
    %533 = vmatprep.subr.mxu0 %v173
    %534 = vmatpush1.xpose.msra.mxu0 %v172
    %535 = vmatprep.subr.mxu0 %v169
    %536 = vmatpush1.xpose.msra.mxu0 %v168
    %537 = vmatprep.subr.mxu0 %v165
    %538 = vmatpush1.xpose.msra.mxu0 %v164
    %539 = vmatprep.subr.mxu0 %v161
    %540 = vmatpush1.xpose.msra.mxu0 %v160
    %541 = vmatprep.subr.mxu0 %v157
    %542 = vmatpush1.xpose.msra.mxu0 %v156
    %543 = vmatprep.subr.mxu0 %v153
    %544 = vmatpush1.xpose.msra.mxu0 %v152
    %545 = vmatprep.subr.mxu0 %v149
    %546 = vmatpush1.xpose.msra.mxu0 %v148
    %547 = vmatprep.subr.mxu0 %v273
    %548 = vmatpush2.xpose.msra.mxu0 %v272
    %549 = vmatprep.subr.mxu0 %v269
    %550 = vmatpush2.xpose.msra.mxu0 %v268
    %551 = vmatprep.subr.mxu0 %v265
    %552 = vmatpush2.xpose.msra.mxu0 %v264
    %553 = vmatprep.subr.mxu0 %v261
    %554 = vmatpush2.xpose.msra.mxu0 %v260
    %555 = vmatprep.subr.mxu0 %v257
    %556 = vmatpush2.xpose.msra.mxu0 %v256
    %557 = vmatprep.subr.mxu0 %v253
    %558 = vmatpush2.xpose.msra.mxu0 %v252
    %559 = vmatprep.subr.mxu0 %v249
    %560 = vmatpush2.xpose.msra.mxu0 %v248
    %561 = vmatprep.subr.mxu0 %v245
    %562 = vmatpush2.xpose.msra.mxu0 %v244
    %563 = vmatprep.subr.mxu0 %v241
    %564 = vmatpush2.xpose.msra.mxu0 %v240
    %565 = vmatprep.subr.mxu0 %v237
    %566 = vmatpush2.xpose.msra.mxu0 %v236
    %567 = vmatprep.subr.mxu0 %v233
    %568 = vmatpush2.xpose.msra.mxu0 %v232
    %569 = vmatprep.subr.mxu0 %v229
    %570 = vmatpush2.xpose.msra.mxu0 %v228
    %571 = vmatprep.subr.mxu0 %v225
    %572 = vmatpush2.xpose.msra.mxu0 %v224
    %573 = vmatprep.subr.mxu0 %v221
    %574 = vmatpush2.xpose.msra.mxu0 %v220
    %575 = vmatprep.subr.mxu0 %v217
    %576 = vmatpush2.xpose.msra.mxu0 %v216
    %577 = vmatprep.subr.mxu0 %v213
    %578 = vmatpush2.xpose.msra.mxu0 %v212
    %579 = vmatprep.mubr.f32.mxu0 %v117
    %580 = vmatmul.mubr.f32.gmra.mxu0 %v116
    %v581 = vpop.f32.mrf.mxu0
    %v582 = vadd.f32 %v469, %v581
    %v583 = vpop.f32.mrf.mxu0
    %v584 = vadd.f32 %v471, %v583
    %585 = vmatprep.mubr.f32.mxu0 %v121
    %586 = vmatmul.mubr.f32.gmra.mxu0 %v120
    %v587 = vpop.f32.mrf.mxu0
    %v588 = vadd.f32 %v475, %v587
    %v589 = vpop.f32.mrf.mxu0
    %v590 = vadd.f32 %v477, %v589
    %591 = vmatprep.mubr.f32.mxu0 %v125
    %592 = vmatmul.mubr.f32.gmra.mxu0 %v124
    %v593 = vpop.f32.mrf.mxu0
    %v594 = vadd.f32 %v481, %v593
    %v595 = vpop.f32.mrf.mxu0
    %v596 = vadd.f32 %v483, %v595
    %597 = vmatprep.mubr.f32.mxu0 %v129
    %598 = vmatmul.mubr.f32.gmra.mxu0 %v128
    %v599 = vpop.f32.mrf.mxu0
    %v600 = vadd.f32 %v487, %v599
    %v601 = vpop.f32.mrf.mxu0
    %v602 = vadd.f32 %v489, %v601
    %603 = vmatprep.mubr.f32.mxu0 %v133
    %604 = vmatmul.mubr.f32.gmra.mxu0 %v132
    %v605 = vpop.f32.mrf.mxu0
    %v606 = vadd.f32 %v493, %v605
    %v607 = vpop.f32.mrf.mxu0
    %v608 = vadd.f32 %v495, %v607
    %609 = vmatprep.mubr.f32.mxu0 %v137
    %610 = vmatmul.mubr.f32.gmra.mxu0 %v136
    %v611 = vpop.f32.mrf.mxu0
    %v612 = vadd.f32 %v499, %v611
    %v613 = vpop.f32.mrf.mxu0
    %v614 = vadd.f32 %v501, %v613
    %615 = vmatprep.mubr.f32.mxu0 %v141
    %616 = vmatmul.mubr.f32.gmra.mxu0 %v140
    %v617 = vpop.f32.mrf.mxu0
    %v618 = vadd.f32 %v505, %v617
    %v619 = vpop.f32.mrf.mxu0
    %v620 = vadd.f32 %v507, %v619
    %621 = vmatprep.mubr.f32.mxu0 %v145
    %622 = vmatmul.mubr.f32.gmra.mxu0 %v144
    %v623 = vpop.f32.mrf.mxu0
    %v624 = vadd.f32 %v511, %v623
    %v625 = vpop.f32.mrf.mxu0
    %v626 = vadd.f32 %v513, %v625
    %627 = vdwg.mxu0
    %628 = vmatprep.subr.mxu0 %v335
    %629 = vmatpush1.xpose.msra.mxu0 %v334
    %630 = vmatprep.subr.mxu0 %v331
    %631 = vmatpush1.xpose.msra.mxu0 %v330
    %632 = vmatprep.subr.mxu0 %v327
    %633 = vmatpush1.xpose.msra.mxu0 %v326
    %634 = vmatprep.subr.mxu0 %v323
    %635 = vmatpush1.xpose.msra.mxu0 %v322
    %636 = vmatprep.subr.mxu0 %v319
    %637 = vmatpush1.xpose.msra.mxu0 %v318
    %638 = vmatprep.subr.mxu0 %v315
    %639 = vmatpush1.xpose.msra.mxu0 %v314
    %640 = vmatprep.subr.mxu0 %v311
    %641 = vmatpush1.xpose.msra.mxu0 %v310
    %642 = vmatprep.subr.mxu0 %v307
    %643 = vmatpush1.xpose.msra.mxu0 %v306
    %644 = vmatprep.subr.mxu0 %v303
    %645 = vmatpush1.xpose.msra.mxu0 %v302
    %646 = vmatprep.subr.mxu0 %v299
    %647 = vmatpush1.xpose.msra.mxu0 %v298
    %648 = vmatprep.subr.mxu0 %v295
    %649 = vmatpush1.xpose.msra.mxu0 %v294
    %650 = vmatprep.subr.mxu0 %v291
    %651 = vmatpush1.xpose.msra.mxu0 %v290
    %652 = vmatprep.subr.mxu0 %v287
    %653 = vmatpush1.xpose.msra.mxu0 %v286
    %654 = vmatprep.subr.mxu0 %v283
    %655 = vmatpush1.xpose.msra.mxu0 %v282
    %656 = vmatprep.subr.mxu0 %v279
    %657 = vmatpush1.xpose.msra.mxu0 %v278
    %658 = vmatprep.subr.mxu0 %v275
    %659 = vmatpush1.xpose.msra.mxu0 %v274
    %660 = vmatprep.subr.mxu0 %v399
    %661 = vmatpush2.xpose.msra.mxu0 %v398
    %662 = vmatprep.subr.mxu0 %v395
    %663 = vmatpush2.xpose.msra.mxu0 %v394
    %664 = vmatprep.subr.mxu0 %v391
    %665 = vmatpush2.xpose.msra.mxu0 %v390
    %666 = vmatprep.subr.mxu0 %v387
    %667 = vmatpush2.xpose.msra.mxu0 %v386
    %668 = vmatprep.subr.mxu0 %v383
    %669 = vmatpush2.xpose.msra.mxu0 %v382
    %670 = vmatprep.subr.mxu0 %v379
    %671 = vmatpush2.xpose.msra.mxu0 %v378
    %672 = vmatprep.subr.mxu0 %v375
    %673 = vmatpush2.xpose.msra.mxu0 %v374
    %674 = vmatprep.subr.mxu0 %v371
    %675 = vmatpush2.xpose.msra.mxu0 %v370
    %676 = vmatprep.subr.mxu0 %v367
    %677 = vmatpush2.xpose.msra.mxu0 %v366
    %678 = vmatprep.subr.mxu0 %v363
    %679 = vmatpush2.xpose.msra.mxu0 %v362
    %680 = vmatprep.subr.mxu0 %v359
    %681 = vmatpush2.xpose.msra.mxu0 %v358
    %682 = vmatprep.subr.mxu0 %v355
    %683 = vmatpush2.xpose.msra.mxu0 %v354
    %684 = vmatprep.subr.mxu0 %v351
    %685 = vmatpush2.xpose.msra.mxu0 %v350
    %686 = vmatprep.subr.mxu0 %v347
    %687 = vmatpush2.xpose.msra.mxu0 %v346
    %688 = vmatprep.subr.mxu0 %v343
    %689 = vmatpush2.xpose.msra.mxu0 %v342
    %690 = vmatprep.subr.mxu0 %v339
    %691 = vmatpush2.xpose.msra.mxu0 %v338
    %692 = vmatprep.mubr.f32.mxu0 %v115
    %693 = vmatmul.mubr.f32.gmra.mxu0 %v114
    %v694 = vpop.f32.mrf.mxu0
    %v695 = vadd.f32 0.0, %v694
    %v696 = vpop.f32.mrf.mxu0
    %v697 = vadd.f32 0.0, %v696
    %698 = vmatprep.mubr.f32.mxu0 %v119
    %699 = vmatmul.mubr.f32.gmra.mxu0 %v118
    %v700 = vpop.f32.mrf.mxu0
    %v701 = vadd.f32 0.0, %v700
    %v702 = vpop.f32.mrf.mxu0
    %v703 = vadd.f32 0.0, %v702
    %704 = vmatprep.mubr.f32.mxu0 %v123
    %705 = vmatmul.mubr.f32.gmra.mxu0 %v122
    %v706 = vpop.f32.mrf.mxu0
    %v707 = vadd.f32 0.0, %v706
    %v708 = vpop.f32.mrf.mxu0
    %v709 = vadd.f32 0.0, %v708
    %710 = vmatprep.mubr.f32.mxu0 %v127
    %711 = vmatmul.mubr.f32.gmra.mxu0 %v126
    %v712 = vpop.f32.mrf.mxu0
    %v713 = vadd.f32 0.0, %v712
    %v714 = vpop.f32.mrf.mxu0
    %v715 = vadd.f32 0.0, %v714
    %716 = vmatprep.mubr.f32.mxu0 %v131
    %717 = vmatmul.mubr.f32.gmra.mxu0 %v130
    %v718 = vpop.f32.mrf.mxu0
    %v719 = vadd.f32 0.0, %v718
    %v720 = vpop.f32.mrf.mxu0
    %v721 = vadd.f32 0.0, %v720
    %722 = vmatprep.mubr.f32.mxu0 %v135
    %723 = vmatmul.mubr.f32.gmra.mxu0 %v134
    %v724 = vpop.f32.mrf.mxu0
    %v725 = vadd.f32 0.0, %v724
    %v726 = vpop.f32.mrf.mxu0
    %v727 = vadd.f32 0.0, %v726
    %728 = vmatprep.mubr.f32.mxu0 %v139
    %729 = vmatmul.mubr.f32.gmra.mxu0 %v138
    %v730 = vpop.f32.mrf.mxu0
    %v731 = vadd.f32 0.0, %v730
    %v732 = vpop.f32.mrf.mxu0
    %v733 = vadd.f32 0.0, %v732
    %734 = vmatprep.mubr.f32.mxu0 %v143
    %735 = vmatmul.mubr.f32.gmra.mxu0 %v142
    %v736 = vpop.f32.mrf.mxu0
    %v737 = vadd.f32 0.0, %v736
    %v738 = vpop.f32.mrf.mxu0
    %v739 = vadd.f32 0.0, %v738
    %740 = vdwg.mxu0
    %741 = vmatprep.subr.mxu0 %v337
    %742 = vmatpush1.xpose.msra.mxu0 %v336
    %743 = vmatprep.subr.mxu0 %v333
    %744 = vmatpush1.xpose.msra.mxu0 %v332
    %745 = vmatprep.subr.mxu0 %v329
    %746 = vmatpush1.xpose.msra.mxu0 %v328
    %747 = vmatprep.subr.mxu0 %v325
    %748 = vmatpush1.xpose.msra.mxu0 %v324
    %749 = vmatprep.subr.mxu0 %v321
    %750 = vmatpush1.xpose.msra.mxu0 %v320
    %751 = vmatprep.subr.mxu0 %v317
    %752 = vmatpush1.xpose.msra.mxu0 %v316
    %753 = vmatprep.subr.mxu0 %v313
    %754 = vmatpush1.xpose.msra.mxu0 %v312
    %755 = vmatprep.subr.mxu0 %v309
    %756 = vmatpush1.xpose.msra.mxu0 %v308
    %757 = vmatprep.subr.mxu0 %v305
    %758 = vmatpush1.xpose.msra.mxu0 %v304
    %759 = vmatprep.subr.mxu0 %v301
    %760 = vmatpush1.xpose.msra.mxu0 %v300
    %761 = vmatprep.subr.mxu0 %v297
    %762 = vmatpush1.xpose.msra.mxu0 %v296
    %763 = vmatprep.subr.mxu0 %v293
    %764 = vmatpush1.xpose.msra.mxu0 %v292
    %765 = vmatprep.subr.mxu0 %v289
    %766 = vmatpush1.xpose.msra.mxu0 %v288
    %767 = vmatprep.subr.mxu0 %v285
    %768 = vmatpush1.xpose.msra.mxu0 %v284
    %769 = vmatprep.subr.mxu0 %v281
    %770 = vmatpush1.xpose.msra.mxu0 %v280
    %771 = vmatprep.subr.mxu0 %v277
    %772 = vmatpush1.xpose.msra.mxu0 %v276
    %773 = vmatprep.subr.mxu0 %v401
    %774 = vmatpush2.xpose.msra.mxu0 %v400
    %775 = vmatprep.subr.mxu0 %v397
    %776 = vmatpush2.xpose.msra.mxu0 %v396
    %777 = vmatprep.subr.mxu0 %v393
    %778 = vmatpush2.xpose.msra.mxu0 %v392
    %779 = vmatprep.subr.mxu0 %v389
    %780 = vmatpush2.xpose.msra.mxu0 %v388
    %781 = vmatprep.subr.mxu0 %v385
    %782 = vmatpush2.xpose.msra.mxu0 %v384
    %783 = vmatprep.subr.mxu0 %v381
    %784 = vmatpush2.xpose.msra.mxu0 %v380
    %785 = vmatprep.subr.mxu0 %v377
    %786 = vmatpush2.xpose.msra.mxu0 %v376
    %787 = vmatprep.subr.mxu0 %v373
    %788 = vmatpush2.xpose.msra.mxu0 %v372
    %789 = vmatprep.subr.mxu0 %v369
    %790 = vmatpush2.xpose.msra.mxu0 %v368
    %791 = vmatprep.subr.mxu0 %v365
    %792 = vmatpush2.xpose.msra.mxu0 %v364
    %793 = vmatprep.subr.mxu0 %v361
    %794 = vmatpush2.xpose.msra.mxu0 %v360
    %795 = vmatprep.subr.mxu0 %v357
    %796 = vmatpush2.xpose.msra.mxu0 %v356
    %797 = vmatprep.subr.mxu0 %v353
    %798 = vmatpush2.xpose.msra.mxu0 %v352
    %799 = vmatprep.subr.mxu0 %v349
    %800 = vmatpush2.xpose.msra.mxu0 %v348
    %801 = vmatprep.subr.mxu0 %v345
    %802 = vmatpush2.xpose.msra.mxu0 %v344
    %803 = vmatprep.subr.mxu0 %v341
    %804 = vmatpush2.xpose.msra.mxu0 %v340
    %805 = vmatprep.mubr.f32.mxu0 %v117
    %806 = vmatmul.mubr.f32.gmra.mxu0 %v116
    %v807 = vpop.f32.mrf.mxu0
    %v808 = vadd.f32 %v695, %v807
    %v809 = vpop.f32.mrf.mxu0
    %v810 = vadd.f32 %v697, %v809
    %811 = vmatprep.mubr.f32.mxu0 %v121
    %812 = vmatmul.mubr.f32.gmra.mxu0 %v120
    %v813 = vpop.f32.mrf.mxu0
    %v814 = vadd.f32 %v701, %v813
    %v815 = vpop.f32.mrf.mxu0
    %v816 = vadd.f32 %v703, %v815
    %817 = vmatprep.mubr.f32.mxu0 %v125
    %818 = vmatmul.mubr.f32.gmra.mxu0 %v124
    %v819 = vpop.f32.mrf.mxu0
    %v820 = vadd.f32 %v707, %v819
    %v821 = vpop.f32.mrf.mxu0
    %v822 = vadd.f32 %v709, %v821
    %823 = vmatprep.mubr.f32.mxu0 %v129
    %824 = vmatmul.mubr.f32.gmra.mxu0 %v128
    %v825 = vpop.f32.mrf.mxu0
    %v826 = vadd.f32 %v713, %v825
    %v827 = vpop.f32.mrf.mxu0
    %v828 = vadd.f32 %v715, %v827
    %829 = vmatprep.mubr.f32.mxu0 %v133
    %830 = vmatmul.mubr.f32.gmra.mxu0 %v132
    %v831 = vpop.f32.mrf.mxu0
    %v832 = vadd.f32 %v719, %v831
    %v833 = vpop.f32.mrf.mxu0
    %v834 = vadd.f32 %v721, %v833
    %835 = vmatprep.mubr.f32.mxu0 %v137
    %836 = vmatmul.mubr.f32.gmra.mxu0 %v136
    %v837 = vpop.f32.mrf.mxu0
    %v838 = vadd.f32 %v725, %v837
    %v839 = vpop.f32.mrf.mxu0
    %v840 = vadd.f32 %v727, %v839
    %841 = vmatprep.mubr.f32.mxu0 %v141
    %842 = vmatmul.mubr.f32.gmra.mxu0 %v140
    %v843 = vpop.f32.mrf.mxu0
    %v844 = vadd.f32 %v731, %v843
    %v845 = vpop.f32.mrf.mxu0
    %v846 = vadd.f32 %v733, %v845
    %847 = vmatprep.mubr.f32.mxu0 %v145
    %848 = vmatmul.mubr.f32.gmra.mxu0 %v144
    %v849 = vpop.f32.mrf.mxu0
    %v850 = vadd.f32 %v737, %v849
    %v851 = vpop.f32.mrf.mxu0
    %v852 = vadd.f32 %v739, %v851
    %853 = vdwg.mxu0
    %v854 = vadd.f32 %v82, %v582
    %v855 = vadd.f32 %v83, %v584
    %v856 = vadd.f32 %v84, %v808
    %v857 = vadd.f32 %v85, %v810
    %v858 = vadd.f32 %v86, %v588
    %v859 = vadd.f32 %v87, %v590
    %v860 = vadd.f32 %v88, %v814
    %v861 = vadd.f32 %v89, %v816
    %v862 = vadd.f32 %v90, %v594
    %v863 = vadd.f32 %v91, %v596
    %v864 = vadd.f32 %v92, %v820
    %v865 = vadd.f32 %v93, %v822
    %v866 = vadd.f32 %v94, %v600
    %v867 = vadd.f32 %v95, %v602
    %v868 = vadd.f32 %v96, %v826
    %v869 = vadd.f32 %v97, %v828
    %v870 = vadd.f32 %v98, %v606
    %v871 = vadd.f32 %v99, %v608
    %v872 = vadd.f32 %v100, %v832
    %v873 = vadd.f32 %v101, %v834
    %v874 = vadd.f32 %v102, %v612
    %v875 = vadd.f32 %v103, %v614
    %v876 = vadd.f32 %v104, %v838
    %v877 = vadd.f32 %v105, %v840
    %v878 = vadd.f32 %v106, %v618
    %v879 = vadd.f32 %v107, %v620
    %v880 = vadd.f32 %v108, %v844
    %v881 = vadd.f32 %v109, %v846
    %v882 = vadd.f32 %v110, %v624
    %v883 = vadd.f32 %v111, %v626
    %v884 = vadd.f32 %v112, %v850
    %v885 = vadd.f32 %v113, %v852
    %886 = vst [vmem:[#allocation2] sm:$0xff] %v854
    %887 = vst [vmem:[#allocation2 + $0x8] sm:$0xff] %v855
    %888 = vst [vmem:[#allocation2 + $0x10] sm:$0xff] %v856
    %889 = vst [vmem:[#allocation2 + $0x18] sm:$0xff] %v857
    %890 = vst [vmem:[#allocation2 + $0x20] sm:$0xff] %v858
    %891 = vst [vmem:[#allocation2 + $0x28] sm:$0xff] %v859
    %892 = vst [vmem:[#allocation2 + $0x30] sm:$0xff] %v860
    %893 = vst [vmem:[#allocation2 + $0x38] sm:$0xff] %v861
    %894 = vst [vmem:[#allocation2 + $0x40] sm:$0xff] %v862
    %895 = vst [vmem:[#allocation2 + $0x48] sm:$0xff] %v863
    %896 = vst [vmem:[#allocation2 + $0x50] sm:$0xff] %v864
    %897 = vst [vmem:[#allocation2 + $0x58] sm:$0xff] %v865
    %898 = vst [vmem:[#allocation2 + $0x60] sm:$0xff] %v866
    %899 = vst [vmem:[#allocation2 + $0x68] sm:$0xff] %v867
    %900 = vst [vmem:[#allocation2 + $0x70] sm:$0xff] %v868
    %901 = vst [vmem:[#allocation2 + $0x78] sm:$0xff] %v869
    %902 = vst [vmem:[#allocation2 + $0x80] sm:$0xff] %v870
    %903 = vst [vmem:[#allocation2 + $0x88] sm:$0xff] %v871
    %904 = vst [vmem:[#allocation2 + $0x90] sm:$0xff] %v872
    %905 = vst [vmem:[#allocation2 + $0x98] sm:$0xff] %v873
    %906 = vst [vmem:[#allocation2 + $0xa0] sm:$0xff] %v874
    %907 = vst [vmem:[#allocation2 + $0xa8] sm:$0xff] %v875
    %908 = vst [vmem:[#allocation2 + $0xb0] sm:$0xff] %v876
    %909 = vst [vmem:[#allocation2 + $0xb8] sm:$0xff] %v877
    %910 = vst [vmem:[#allocation2 + $0xc0] sm:$0xff] %v878
    %911 = vst [vmem:[#allocation2 + $0xc8] sm:$0xff] %v879
    %912 = vst [vmem:[#allocation2 + $0xd0] sm:$0xff] %v880
    %913 = vst [vmem:[#allocation2 + $0xd8] sm:$0xff] %v881
    %914 = vst [vmem:[#allocation2 + $0xe0] sm:$0xff] %v882
    %915 = vst [vmem:[#allocation2 + $0xe8] sm:$0xff] %v883
    %916 = vst [vmem:[#allocation2 + $0xf0] sm:$0xff] %v884
    %917 = vst [vmem:[#allocation2 + $0xf8] sm:$0xff] %v885
    // Predicated region
    $region30: #{batch_normalized_linear.1} parent=1 // pred_check
      %p918 = pneg %p46
    $region31: #{batch_normalized_linear.1} parent=1 // pred_check_branch
      %920 = sbr.rel (%p918) target = $region33
    $region32: #{batch_normalized_linear.1} parent=1 // pred_region
      %v921 = vld [vmem:[#allocation2] sm:$0xff]
      %v922 = vld [vmem:[#allocation2 + $0x8] sm:$0xff]
      %v923 = vld [vmem:[#allocation2 + $0x10] sm:$0xff]
      %v924 = vld [vmem:[#allocation2 + $0x18] sm:$0xff]
      %v925 = vld [vmem:[#allocation2 + $0x20] sm:$0xff]
      %v926 = vld [vmem:[#allocation2 + $0x28] sm:$0xff]
      %v927 = vld [vmem:[#allocation2 + $0x30] sm:$0xff]
      %v928 = vld [vmem:[#allocation2 + $0x38] sm:$0xff]
      %v929 = vld [vmem:[#allocation2 + $0x40] sm:$0xff]
      %v930 = vld [vmem:[#allocation2 + $0x48] sm:$0xff]
      %v931 = vld [vmem:[#allocation2 + $0x50] sm:$0xff]
      %v932 = vld [vmem:[#allocation2 + $0x58] sm:$0xff]
      %v933 = vld [vmem:[#allocation2 + $0x60] sm:$0xff]
      %v934 = vld [vmem:[#allocation2 + $0x68] sm:$0xff]
      %v935 = vld [vmem:[#allocation2 + $0x70] sm:$0xff]
      %v936 = vld [vmem:[#allocation2 + $0x78] sm:$0xff]
      %v937 = vld [vmem:[#allocation2 + $0x80] sm:$0xff]
      %v938 = vld [vmem:[#allocation2 + $0x88] sm:$0xff]
      %v939 = vld [vmem:[#allocation2 + $0x90] sm:$0xff]
      %v940 = vld [vmem:[#allocation2 + $0x98] sm:$0xff]
      %v941 = vld [vmem:[#allocation2 + $0xa0] sm:$0xff]
      %v942 = vld [vmem:[#allocation2 + $0xa8] sm:$0xff]
      %v943 = vld [vmem:[#allocation2 + $0xb0] sm:$0xff]
      %v944 = vld [vmem:[#allocation2 + $0xb8] sm:$0xff]
      %v945 = vld [vmem:[#allocation2 + $0xc0] sm:$0xff]
      %v946 = vld [vmem:[#allocation2 + $0xc8] sm:$0xff]
      %v947 = vld [vmem:[#allocation2 + $0xd0] sm:$0xff]
      %v948 = vld [vmem:[#allocation2 + $0xd8] sm:$0xff]
      %v949 = vld [vmem:[#allocation2 + $0xe0] sm:$0xff]
      %v950 = vld [vmem:[#allocation2 + $0xe8] sm:$0xff]
      %v951 = vld [vmem:[#allocation2 + $0xf0] sm:$0xff]
      %v952 = vld [vmem:[#allocation2 + $0xf8] sm:$0xff]
      %v953 = vadd.f32 %v921, %v925
      %v954 = vadd.f32 %v953, %v929
      %v955 = vadd.f32 %v954, %v933
      %v956 = vadd.f32 %v955, %v937
      %v957 = vadd.f32 %v956, %v941
      %v958 = vadd.f32 %v957, %v945
      %v959 = vadd.f32 %v958, %v949
      %v960 = vrot.slane %v959, 4
      %v961 = vadd.f32 %v959, %v960
      %v962 = vrot.slane %v961, 2
      %v963 = vadd.f32 %v961, %v962
      %v964 = vrot.slane %v963, 1
      %v965 = vadd.f32 %v963, %v964
      %v966 = vadd.f32 %v922, %v926
      %v967 = vadd.f32 %v966, %v930
      %v968 = vadd.f32 %v967, %v934
      %v969 = vadd.f32 %v968, %v938
      %v970 = vadd.f32 %v969, %v942
      %v971 = vadd.f32 %v970, %v946
      %v972 = vadd.f32 %v971, %v950
      %v973 = vrot.slane %v972, 4
      %v974 = vadd.f32 %v972, %v973
      %v975 = vrot.slane %v974, 2
      %v976 = vadd.f32 %v974, %v975
      %v977 = vrot.slane %v976, 1
      %v978 = vadd.f32 %v976, %v977
      %v979 = vadd.f32 %v923, %v927
      %v980 = vadd.f32 %v979, %v931
      %v981 = vadd.f32 %v980, %v935
      %v982 = vadd.f32 %v981, %v939
      %v983 = vadd.f32 %v982, %v943
      %v984 = vadd.f32 %v983, %v947
      %v985 = vadd.f32 %v984, %v951
      %v986 = vrot.slane %v985, 4
      %v987 = vadd.f32 %v985, %v986
      %v988 = vrot.slane %v987, 2
      %v989 = vadd.f32 %v987, %v988
      %v990 = vrot.slane %v989, 1
      %v991 = vadd.f32 %v989, %v990
      %v992 = vadd.f32 %v924, %v928
      %v993 = vadd.f32 %v992, %v932
      %v994 = vadd.f32 %v993, %v936
      %v995 = vadd.f32 %v994, %v940
      %v996 = vadd.f32 %v995, %v944
      %v997 = vadd.f32 %v996, %v948
      %v998 = vadd.f32 %v997, %v952
      %v999 = vrot.slane %v998, 4
      %v1000 = vadd.f32 %v998, %v999
      %v1001 = vrot.slane %v1000, 2
      %v1002 = vadd.f32 %v1000, %v1001
      %v1003 = vrot.slane %v1002, 1
      %v1004 = vadd.f32 %v1002, %v1003
      %v1005 = vmul.f32 %v965, 0.015625
      %v1006 = vmul.f32 %v978, 0.015625
      %v1007 = vmul.f32 %v991, 0.015625
      %v1008 = vmul.f32 %v1004, 0.015625
      %v1009 = vmul.f32 %v921, %v921
      %v1010 = vmul.f32 %v922, %v922
      %v1011 = vmul.f32 %v923, %v923
      %v1012 = vmul.f32 %v924, %v924
      %v1013 = vmul.f32 %v925, %v925
      %v1014 = vmul.f32 %v926, %v926
      %v1015 = vmul.f32 %v927, %v927
      %v1016 = vmul.f32 %v928, %v928
      %v1017 = vmul.f32 %v929, %v929
      %v1018 = vmul.f32 %v930, %v930
      %v1019 = vmul.f32 %v931, %v931
      %v1020 = vmul.f32 %v932, %v932
      %v1021 = vmul.f32 %v933, %v933
      %v1022 = vmul.f32 %v934, %v934
      %v1023 = vmul.f32 %v935, %v935
      %v1024 = vmul.f32 %v936, %v936
      %v1025 = vmul.f32 %v937, %v937
      %v1026 = vmul.f32 %v938, %v938
      %v1027 = vmul.f32 %v939, %v939
      %v1028 = vmul.f32 %v940, %v940
      %v1029 = vmul.f32 %v941, %v941
      %v1030 = vmul.f32 %v942, %v942
      %v1031 = vmul.f32 %v943, %v943
      %v1032 = vmul.f32 %v944, %v944
      %v1033 = vmul.f32 %v945, %v945
      %v1034 = vmul.f32 %v946, %v946
      %v1035 = vmul.f32 %v947, %v947
      %v1036 = vmul.f32 %v948, %v948
      %v1037 = vmul.f32 %v949, %v949
      %v1038 = vmul.f32 %v950, %v950
      %v1039 = vmul.f32 %v951, %v951
      %v1040 = vmul.f32 %v952, %v952
      %v1041 = vadd.f32 %v1009, %v1013
      %v1042 = vadd.f32 %v1041, %v1017
      %v1043 = vadd.f32 %v1042, %v1021
      %v1044 = vadd.f32 %v1043, %v1025
      %v1045 = vadd.f32 %v1044, %v1029
      %v1046 = vadd.f32 %v1045, %v1033
      %v1047 = vadd.f32 %v1046, %v1037
      %v1048 = vrot.slane %v1047, 4
      %v1049 = vadd.f32 %v1047, %v1048
      %v1050 = vrot.slane %v1049, 2
      %v1051 = vadd.f32 %v1049, %v1050
      %v1052 = vrot.slane %v1051, 1
      %v1053 = vadd.f32 %v1051, %v1052
      %v1054 = vadd.f32 %v1010, %v1014
      %v1055 = vadd.f32 %v1054, %v1018
      %v1056 = vadd.f32 %v1055, %v1022
      %v1057 = vadd.f32 %v1056, %v1026
      %v1058 = vadd.f32 %v1057, %v1030
      %v1059 = vadd.f32 %v1058, %v1034
      %v1060 = vadd.f32 %v1059, %v1038
      %v1061 = vrot.slane %v1060, 4
      %v1062 = vadd.f32 %v1060, %v1061
      %v1063 = vrot.slane %v1062, 2
      %v1064 = vadd.f32 %v1062, %v1063
      %v1065 = vrot.slane %v1064, 1
      %v1066 = vadd.f32 %v1064, %v1065
      %v1067 = vadd.f32 %v1011, %v1015
      %v1068 = vadd.f32 %v1067, %v1019
      %v1069 = vadd.f32 %v1068, %v1023
      %v1070 = vadd.f32 %v1069, %v1027
      %v1071 = vadd.f32 %v1070, %v1031
      %v1072 = vadd.f32 %v1071, %v1035
      %v1073 = vadd.f32 %v1072, %v1039
      %v1074 = vrot.slane %v1073, 4
      %v1075 = vadd.f32 %v1073, %v1074
      %v1076 = vrot.slane %v1075, 2
      %v1077 = vadd.f32 %v1075, %v1076
      %v1078 = vrot.slane %v1077, 1
      %v1079 = vadd.f32 %v1077, %v1078
      %v1080 = vadd.f32 %v1012, %v1016
      %v1081 = vadd.f32 %v1080, %v1020
      %v1082 = vadd.f32 %v1081, %v1024
      %v1083 = vadd.f32 %v1082, %v1028
      %v1084 = vadd.f32 %v1083, %v1032
      %v1085 = vadd.f32 %v1084, %v1036
      %v1086 = vadd.f32 %v1085, %v1040
      %v1087 = vrot.slane %v1086, 4
      %v1088 = vadd.f32 %v1086, %v1087
      %v1089 = vrot.slane %v1088, 2
      %v1090 = vadd.f32 %v1088, %v1089
      %v1091 = vrot.slane %v1090, 1
      %v1092 = vadd.f32 %v1090, %v1091
      %v1093 = vmul.f32 %v1053, 0.015625
      %v1094 = vmul.f32 %v1066, 0.015625
      %v1095 = vmul.f32 %v1079, 0.015625
      %v1096 = vmul.f32 %v1092, 0.015625
      %v1097 = vmul.f32 %v1005, %v1005
      %v1098 = vmul.f32 %v1006, %v1006
      %v1099 = vmul.f32 %v1007, %v1007
      %v1100 = vmul.f32 %v1008, %v1008
      %v1101 = vsub.f32 %v1093, %v1097
      %v1102 = vsub.f32 %v1094, %v1098
      %v1103 = vsub.f32 %v1095, %v1099
      %v1104 = vsub.f32 %v1096, %v1100
      %v1105 = vmax.f32 %v1101, 0.0
      %v1106 = vmax.f32 %v1102, 0.0
      %v1107 = vmax.f32 %v1103, 0.0
      %v1108 = vmax.f32 %v1104, 0.0
      %v1109 = vadd.f32 %v1105, 1e-05
      %v1110 = vadd.f32 %v1106, 1e-05
      %v1111 = vadd.f32 %v1107, 1e-05
      %v1112 = vadd.f32 %v1108, 1e-05
      %v1113 = vrsqrt.pop %v1109
      %v1114 = vrsqrt.pop %v1110
      %v1115 = vrsqrt.pop %v1111
      %v1116 = vrsqrt.pop %v1112
      %v1117 = vld [vmem:[%s2] sm:$0xf]
      %v1119 = vlaneseq
      %v1120 = vshrl.u32 %v1119, 7
      %v1121 = vsub.s32 0, %v1120
      %v1122 = vrot.slane %v1117, %v1121
      %v1123 = vlaneseq
      %v1124 = vshrl.u32 %v1123, 7
      %v1125 = vsub.s32 1, %v1124
      %v1126 = vrot.slane %v1117, %v1125
      %v1127 = vlaneseq
      %v1128 = vshrl.u32 %v1127, 7
      %v1129 = vsub.s32 2, %v1128
      %v1130 = vrot.slane %v1117, %v1129
      %v1131 = vlaneseq
      %v1132 = vshrl.u32 %v1131, 7
      %v1133 = vsub.s32 3, %v1132
      %v1134 = vrot.slane %v1117, %v1133
      %v1139 = vmul.f32 %v1113, %v1122
      %v1140 = vmul.f32 %v1114, %v1126
      %v1141 = vmul.f32 %v1115, %v1130
      %v1142 = vmul.f32 %v1116, %v1134
      %v1143 = vld [vmem:[%s3] sm:$0xf]
      %v1144 = vmul.f32 %v1005, %v1139
      %v1145 = vmul.f32 %v1006, %v1140
      %v1146 = vmul.f32 %v1007, %v1141
      %v1147 = vmul.f32 %v1008, %v1142
      %v1152 = vcombine.low %v1144, %v1145
      %v1153 = vcombine.low %v1146, %v1147
      %v1155 = vunpack.c.l.s4 1966171168
      %v1156 = vunpack.c.0.s8 %v1155
      %v1157 = vlaneseq
      %v1158 = vshrl.u32 %v1157, 7
      %v1159 = vsub.s32 %v1156, %v1158
      %v1160 = vrot.slane %v1152, %v1159
      %v1162 = vunpack.c.l.s4 1966171168
      %v1163 = vunpack.c.0.s8 %v1162
      %v1164 = vlaneseq
      %v1165 = vshrl.u32 %v1164, 7
      %v1166 = vsub.s32 %v1163, %v1165
      %v1167 = vrot.slane %v1153, %v1166
      %v1168 = vcombine.low %v1160, %v1167
      %v1170 = vunpack.c.l.s4 1966171168
      %v1171 = vunpack.c.0.s8 %v1170
      %v1172 = vlaneseq
      %v1173 = vshrl.u32 %v1172, 7
      %v1174 = vsub.s32 %v1171, %v1173
      %v1175 = vrot.slane %v1168, %v1174
      %v1177 = vsub.f32 %v1143, %v1175
      %v1178 = vlaneseq
      %v1179 = vshrl.u32 %v1178, 7
      %v1180 = vsub.s32 0, %v1179
      %v1181 = vrot.slane %v1139, %v1180
      %v1182 = vlaneseq
      %v1183 = vshrl.u32 %v1182, 7
      %v1184 = vsub.s32 0, %v1183
      %v1185 = vrot.slane %v1140, %v1184
      %v1186 = vlaneseq
      %v1187 = vshrl.u32 %v1186, 7
      %v1188 = vsub.s32 0, %v1187
      %v1189 = vrot.slane %v1141, %v1188
      %v1190 = vlaneseq
      %v1191 = vshrl.u32 %v1190, 7
      %v1192 = vsub.s32 0, %v1191
      %v1193 = vrot.slane %v1142, %v1192
      %v1194 = vmul.f32 %v921, %v1181
      %v1195 = vmul.f32 %v922, %v1185
      %v1196 = vmul.f32 %v923, %v1189
      %v1197 = vmul.f32 %v924, %v1193
      %v1198 = vmul.f32 %v925, %v1181
      %v1199 = vmul.f32 %v926, %v1185
      %v1200 = vmul.f32 %v927, %v1189
      %v1201 = vmul.f32 %v928, %v1193
      %v1202 = vmul.f32 %v929, %v1181
      %v1203 = vmul.f32 %v930, %v1185
      %v1204 = vmul.f32 %v931, %v1189
      %v1205 = vmul.f32 %v932, %v1193
      %v1206 = vmul.f32 %v933, %v1181
      %v1207 = vmul.f32 %v934, %v1185
      %v1208 = vmul.f32 %v935, %v1189
      %v1209 = vmul.f32 %v936, %v1193
      %v1210 = vmul.f32 %v937, %v1181
      %v1211 = vmul.f32 %v938, %v1185
      %v1212 = vmul.f32 %v939, %v1189
      %v1213 = vmul.f32 %v940, %v1193
      %v1214 = vmul.f32 %v941, %v1181
      %v1215 = vmul.f32 %v942, %v1185
      %v1216 = vmul.f32 %v943, %v1189
      %v1217 = vmul.f32 %v944, %v1193
      %v1218 = vmul.f32 %v945, %v1181
      %v1219 = vmul.f32 %v946, %v1185
      %v1220 = vmul.f32 %v947, %v1189
      %v1221 = vmul.f32 %v948, %v1193
      %v1222 = vmul.f32 %v949, %v1181
      %v1223 = vmul.f32 %v950, %v1185
      %v1224 = vmul.f32 %v951, %v1189
      %v1225 = vmul.f32 %v952, %v1193
      %v1227 = vlaneseq
      %v1228 = vshrl.u32 %v1227, 7
      %v1229 = vsub.s32 0, %v1228
      %v1230 = vrot.slane %v1177, %v1229
      %v1231 = vlaneseq
      %v1232 = vshrl.u32 %v1231, 7
      %v1233 = vsub.s32 1, %v1232
      %v1234 = vrot.slane %v1177, %v1233
      %v1235 = vlaneseq
      %v1236 = vshrl.u32 %v1235, 7
      %v1237 = vsub.s32 2, %v1236
      %v1238 = vrot.slane %v1177, %v1237
      %v1239 = vlaneseq
      %v1240 = vshrl.u32 %v1239, 7
      %v1241 = vsub.s32 3, %v1240
      %v1242 = vrot.slane %v1177, %v1241
      %v1247 = vadd.f32 %v1194, %v1230
      %v1248 = vadd.f32 %v1195, %v1234
      %v1249 = vadd.f32 %v1196, %v1238
      %v1250 = vadd.f32 %v1197, %v1242
      %v1251 = vadd.f32 %v1198, %v1230
      %v1252 = vadd.f32 %v1199, %v1234
      %v1253 = vadd.f32 %v1200, %v1238
      %v1254 = vadd.f32 %v1201, %v1242
      %v1255 = vadd.f32 %v1202, %v1230
      %v1256 = vadd.f32 %v1203, %v1234
      %v1257 = vadd.f32 %v1204, %v1238
      %v1258 = vadd.f32 %v1205, %v1242
      %v1259 = vadd.f32 %v1206, %v1230
      %v1260 = vadd.f32 %v1207, %v1234
      %v1261 = vadd.f32 %v1208, %v1238
      %v1262 = vadd.f32 %v1209, %v1242
      %v1263 = vadd.f32 %v1210, %v1230
      %v1264 = vadd.f32 %v1211, %v1234
      %v1265 = vadd.f32 %v1212, %v1238
      %v1266 = vadd.f32 %v1213, %v1242
      %v1267 = vadd.f32 %v1214, %v1230
      %v1268 = vadd.f32 %v1215, %v1234
      %v1269 = vadd.f32 %v1216, %v1238
      %v1270 = vadd.f32 %v1217, %v1242
      %v1271 = vadd.f32 %v1218, %v1230
      %v1272 = vadd.f32 %v1219, %v1234
      %v1273 = vadd.f32 %v1220, %v1238
      %v1274 = vadd.f32 %v1221, %v1242
      %v1275 = vadd.f32 %v1222, %v1230
      %v1276 = vadd.f32 %v1223, %v1234
      %v1277 = vadd.f32 %v1224, %v1238
      %v1278 = vadd.f32 %v1225, %v1242
      %1279 = vst [vmem:[#allocation8] sm:$0xff] %v1247
      %1280 = vst [vmem:[#allocation8 + $0x8] sm:$0xff] %v1248
      %1281 = vst [vmem:[#allocation8 + $0x10] sm:$0xff] %v1249
      %1282 = vst [vmem:[#allocation8 + $0x18] sm:$0xff] %v1250
      %1283 = vst [vmem:[#allocation8 + $0x20] sm:$0xff] %v1251
      %1284 = vst [vmem:[#allocation8 + $0x28] sm:$0xff] %v1252
      %1285 = vst [vmem:[#allocation8 + $0x30] sm:$0xff] %v1253
      %1286 = vst [vmem:[#allocation8 + $0x38] sm:$0xff] %v1254
      %1287 = vst [vmem:[#allocation8 + $0x40] sm:$0xff] %v1255
      %1288 = vst [vmem:[#allocation8 + $0x48] sm:$0xff] %v1256
      %1289 = vst [vmem:[#allocation8 + $0x50] sm:$0xff] %v1257
      %1290 = vst [vmem:[#allocation8 + $0x58] sm:$0xff] %v1258
      %1291 = vst [vmem:[#allocation8 + $0x60] sm:$0xff] %v1259
      %1292 = vst [vmem:[#allocation8 + $0x68] sm:$0xff] %v1260
      %1293 = vst [vmem:[#allocation8 + $0x70] sm:$0xff] %v1261
      %1294 = vst [vmem:[#allocation8 + $0x78] sm:$0xff] %v1262
      %1295 = vst [vmem:[#allocation8 + $0x80] sm:$0xff] %v1263
      %1296 = vst [vmem:[#allocation8 + $0x88] sm:$0xff] %v1264
      %1297 = vst [vmem:[#allocation8 + $0x90] sm:$0xff] %v1265
      %1298 = vst [vmem:[#allocation8 + $0x98] sm:$0xff] %v1266
      %1299 = vst [vmem:[#allocation8 + $0xa0] sm:$0xff] %v1267
      %1300 = vst [vmem:[#allocation8 + $0xa8] sm:$0xff] %v1268
      %1301 = vst [vmem:[#allocation8 + $0xb0] sm:$0xff] %v1269
      %1302 = vst [vmem:[#allocation8 + $0xb8] sm:$0xff] %v1270
      %1303 = vst [vmem:[#allocation8 + $0xc0] sm:$0xff] %v1271
      %1304 = vst [vmem:[#allocation8 + $0xc8] sm:$0xff] %v1272
      %1305 = vst [vmem:[#allocation8 + $0xd0] sm:$0xff] %v1273
      %1306 = vst [vmem:[#allocation8 + $0xd8] sm:$0xff] %v1274
      %1307 = vst [vmem:[#allocation8 + $0xe0] sm:$0xff] %v1275
      %1308 = vst [vmem:[#allocation8 + $0xe8] sm:$0xff] %v1276
      %1309 = vst [vmem:[#allocation8 + $0xf0] sm:$0xff] %v1277
      %1310 = vst [vmem:[#allocation8 + $0xf8] sm:$0xff] %v1278
    $region33: #{batch_normalized_linear.1} parent=1 // pred_fallthru
      _
    // Predicated region
    $region34: #{batch_normalized_linear.1} parent=1 // pred_check
      _
    $region35: #{batch_normalized_linear.1} parent=1 // pred_check_branch
      %1312 = sbr.rel (0) target = $region37
    $region36: #{batch_normalized_linear.1} parent=1 // pred_region
      %s1314 = ssub.s32 4096, 4096
      %1315 = vsyncadd [#allocation5], %s1314
      %s1316 = sshll.u32 [#allocation8], 4
      %s1317 = int_to_ptr.vmem [resolvable:$true] %s1316
      %1322 = dma.vmem_to_hbm [thread:$0]  %s1317, 4096, %s4, [#allocation5], 512, 512, 32
    $region37: #{batch_normalized_linear.1} parent=1 // pred_fallthru
      _
    // Predicated region
    $region38: #{batch_normalized_linear.1} parent=1 // pred_check
      _
    $region39: #{batch_normalized_linear.1} parent=1 // pred_check_branch
      %1324 = sbr.rel (0) target = $region41
    $region40: #{batch_normalized_linear.1} parent=1 // pred_region
      %1325 = dma.done [#allocation5], 4096
    $region41: #{batch_normalized_linear.1} parent=1 // pred_fallthru
      _
    %1326 = vsyncpa [#allocation4], 1
    %1327 = vsyncpa [#allocation7], 1
    %1328 = vsyncpa [#allocation5], 1

</llo_original>
